<compile_context>
chip_gen: v7x
topology: tpu7x:2x2x1
jax: 0.10.0
libtpu: 0.0.40
codegen_flags: <defaults>
</compile_context>

<pallas_src>
import functools

import jax
import jax.numpy as jnp
from jax.experimental import pallas as pl
from jax.experimental.pallas import tpu as pltpu

BN_EPS = 1e-5
VMEM_LIMIT = 32 * 1024 * 1024          # safe on v5e/v6e (128 MiB) and v7x (64 MiB physical)
FUSED_VMEM_BUDGET = 20 * 1024 * 1024   # conservative budget for the fully-fused path


def _round_up(x, m):
    return ((x + m - 1) // m) * m


# --------------------------- Pallas kernels -------------------------------- #
def _fused_layer_kernel(p_ref, w_ref, gb_ref, o_ref, *, inv_m):
    """Whole layer in one block:
       y = patches @ w (bf16 -> f32 acc); batch stats over real rows (zero-padded
       rows contribute 0 to both sums); fold train-mode BN into scale/shift;
       apply scale/shift + ReLU; lane-dense store."""
    y = jnp.dot(p_ref[...], w_ref[...], preferred_element_type=jnp.float32)
    ch_sum = jnp.sum(y, axis=0, keepdims=True)            # (1, Cpad)  XLU
    ch_sq = jnp.sum(y * y, axis=0, keepdims=True)         # (1, Cpad)  XLU
    mean = ch_sum * inv_m
    var = jnp.maximum(ch_sq * inv_m - mean * mean, 0.0)   # biased var (PyTorch train())
    gamma = gb_ref[0:1, :]
    beta = gb_ref[1:2, :]
    scale = gamma * jax.lax.rsqrt(var + BN_EPS)            # EUP
    shift = beta - mean * scale
    o_ref[...] = jnp.maximum(y * scale + shift, 0.0)


def _matmul_stats_kernel(p_ref, w_ref, y_ref, sum_ref, sq_ref):
    """Fallback pass 1, per M-tile: y = patches @ w; accumulate per-channel sum
    and sum-of-squares into resident (1, Cpad) output blocks."""
    i = pl.program_id(0)

    @pl.when(i == 0)
    def _():
        sum_ref[...] = jnp.zeros_like(sum_ref)
        sq_ref[...] = jnp.zeros_like(sq_ref)

    y = jnp.dot(p_ref[...], w_ref[...], preferred_element_type=jnp.float32)
    y_ref[...] = y
    sum_ref[...] += jnp.sum(y, axis=0, keepdims=True)
    sq_ref[...] += jnp.sum(y * y, axis=0, keepdims=True)


def _bn_relu_kernel(y_ref, st_ref, o_ref):
    """Fallback pass 2, per M-tile: out = max(y * scale + shift, 0)."""
    st = st_ref[...]
    o_ref[...] = jnp.maximum(y_ref[...] * st[0:1, :] + st[1:2, :], 0.0)


# --------------------------- pallas_call wrappers --------------------------- #
def fused_conv_bn_relu(patches_bf16, w_bf16, gb, inv_m):
    Mp, Kp = patches_bf16.shape
    Cpad = w_bf16.shape[1]
    kernel = functools.partial(_fused_layer_kernel, inv_m=inv_m)
    return pl.pallas_call(
        kernel,
        out_shape=jax.ShapeDtypeStruct((Mp, Cpad), jnp.float32),
        grid=(1,),
        in_specs=[
            pl.BlockSpec((Mp, Kp), lambda i: (0, 0)),
            pl.BlockSpec((Kp, Cpad), lambda i: (0, 0)),
            pl.BlockSpec((8, Cpad), lambda i: (0, 0)),     # packed gamma/beta
        ],
        out_specs=pl.BlockSpec((Mp, Cpad), lambda i: (0, 0)),
        compiler_params=pltpu.CompilerParams(
            dimension_semantics=("arbitrary",),
            vmem_limit_bytes=VMEM_LIMIT,
        ),
        cost_estimate=pl.CostEstimate(
            flops=2 * Mp * Kp * Cpad,
            transcendentals=Cpad,
            bytes_accessed=Mp * Kp * 2 + Kp * Cpad * 2 + Mp * Cpad * 4 + 8 * Cpad * 4,
        ),
    )(patches_bf16, w_bf16, gb)


def matmul_stats(patches_bf16, w_bf16, tm):
    Mp, Kp = patches_bf16.shape
    Cpad = w_bf16.shape[1]
    return pl.pallas_call(
        _matmul_stats_kernel,
        out_shape=(
            jax.ShapeDtypeStruct((Mp, Cpad), jnp.float32),  # conv output (pre-BN)
            jax.ShapeDtypeStruct((1, Cpad), jnp.float32),   # per-channel sum
            jax.ShapeDtypeStruct((1, Cpad), jnp.float32),   # per-channel sum of squares
        ),
        grid=(Mp // tm,),
        in_specs=[
            pl.BlockSpec((tm, Kp), lambda i: (i, 0)),
            pl.BlockSpec((Kp, Cpad), lambda i: (0, 0)),
        ],
        out_specs=(
            pl.BlockSpec((tm, Cpad), lambda i: (i, 0)),
            pl.BlockSpec((1, Cpad), lambda i: (0, 0)),      # resident accumulator
            pl.BlockSpec((1, Cpad), lambda i: (0, 0)),      # resident accumulator
        ),
        compiler_params=pltpu.CompilerParams(
            dimension_semantics=("arbitrary",),             # stats accumulation => sequential
            vmem_limit_bytes=VMEM_LIMIT,
        ),
        cost_estimate=pl.CostEstimate(
            flops=2 * Mp * Kp * Cpad,
            transcendentals=0,
            bytes_accessed=Mp * Kp * 2 + Kp * Cpad * 2 + Mp * Cpad * 4 + 2 * Cpad * 4,
        ),
    )(patches_bf16, w_bf16)


def bn_relu_apply(y, scale_shift, tm):
    Mp, Cpad = y.shape
    return pl.pallas_call(
        _bn_relu_kernel,
        out_shape=jax.ShapeDtypeStruct((Mp, Cpad), jnp.float32),
        grid=(Mp // tm,),
        in_specs=[
            pl.BlockSpec((tm, Cpad), lambda i: (i, 0)),
            pl.BlockSpec((8, Cpad), lambda i: (0, 0)),
        ],
        out_specs=pl.BlockSpec((tm, Cpad), lambda i: (i, 0)),
        compiler_params=pltpu.CompilerParams(
            dimension_semantics=("parallel",),              # shardable across TCs (v7x megacore)
            vmem_limit_bytes=VMEM_LIMIT,
        ),
    )(y, scale_shift)


# ------------------------------ JAX glue ------------------------------------ #
def _im2col(x_nhwc, k=4, s=2, p=1):
    """Pad + extract (kH,kW) strided patches in bf16.
    Returns (N*Ho*Wo, k*k*C) with column order (kh, kw, Cin) and output dims."""
    # TODO(synk): fuse patch extraction into the matmul kernel (16 shifted-tap
    # accumulation) to avoid materializing the k*k-expanded patch matrix in HBM.
    x = jnp.pad(x_nhwc.astype(jnp.bfloat16), ((0, 0), (p, p), (p, p), (0, 0)))
    N, Hp, Wp, C = x.shape
    Ho = (Hp - k) // s + 1
    Wo = (Wp - k) // s + 1
    cols = []
    for kh in range(k):
        for kw in range(k):
            cols.append(x[:, kh:kh + s * (Ho - 1) + 1:s,
                            kw:kw + s * (Wo - 1) + 1:s, :])
    pt = jnp.stack(cols, axis=3)  # (N, Ho, Wo, k*k, C)
    return pt.reshape(N * Ho * Wo, k * k * C), (N, Ho, Wo)


def _conv_layer(x_nhwc, w_oihw, gamma, beta):
    """Conv(4,2,1) + train-mode BN + ReLU. Conv bias is omitted on purpose:
    it is exactly cancelled by the batch-mean subtraction of BatchNorm."""
    Cout, Cin, kH, kW = w_oihw.shape
    patches, (N, Ho, Wo) = _im2col(x_nhwc, k=kH, s=2, p=1)
    M, K = patches.shape

    # Lane-dense / MXU-friendly padding (exact: padded with zeros).
    Kp = _round_up(K, 128)
    Cpad = _round_up(Cout, 128)

    w_mat = jnp.transpose(w_oihw, (2, 3, 1, 0)).reshape(K, Cout)  # (kh,kw,Cin,Cout)
    w_mat = jnp.pad(w_mat, ((0, Kp - K), (0, Cpad - Cout))).astype(jnp.bfloat16)
    g = jnp.pad(gamma, (0, Cpad - Cout)).reshape(1, Cpad).astype(jnp.float32)
    b = jnp.pad(beta, (0, Cpad - Cout)).reshape(1, Cpad).astype(jnp.float32)
    inv_m = 1.0 / float(M)  # real rows only; padded rows contribute 0 to both sums

    # Estimated VMEM for the fully-fused path (double-buffered operands + temps).
    Mp_fused = _round_up(M, 8)
    fused_bytes = (2 * (Mp_fused * Kp * 2 + Kp * Cpad * 2 + Mp_fused * Cpad * 4)
                   + 3 * Mp_fused * Cpad * 4)

    if fused_bytes <= FUSED_VMEM_BUDGET:
        # --- Fully fused single-kernel layer (no intermediate HBM round trip). ---
        patches = jnp.pad(patches, ((0, Mp_fused - M), (0, Kp - K)))
        gb = jnp.concatenate([g, b, jnp.zeros((6, Cpad), jnp.float32)], axis=0)  # (8, Cpad)
        out = fused_conv_bn_relu(patches, w_mat, gb, inv_m)
    else:
        # --- Fallback: tiled two-pass path for layers that exceed VMEM. ---
        tm = 512 if M > 512 else _round_up(M, 8)
        Mp = _round_up(M, tm)
        patches = jnp.pad(patches, ((0, Mp - M), (0, Kp - K)))

        y, ch_sum, ch_sq = matmul_stats(patches, w_mat, tm)

        mean = ch_sum * inv_m
        var = jnp.maximum(ch_sq * inv_m - mean * mean, 0.0)
        scale = g * jax.lax.rsqrt(var + BN_EPS)
        shift = b - mean * scale
        scale_shift = jnp.concatenate(
            [scale, shift, jnp.zeros((6, Cpad), jnp.float32)], axis=0)  # (8, Cpad)

        out = bn_relu_apply(y, scale_shift, tm)

    return out[:M, :Cout].reshape(N, Ho, Wo, Cout)


def init_params(key):
    ks = jax.random.split(key, 12)

    def conv_w(k, cout, cin, kh, kw):
        fan_in = cin * kh * kw
        return jax.random.normal(k, (cout, cin, kh, kw), jnp.float32) / jnp.sqrt(fan_in)

    params = {
        "w1": conv_w(ks[0], 32, 3, 4, 4),
        "b1": 0.01 * jax.random.normal(ks[1], (32,), jnp.float32),   # cancelled by BN
        "g1": 1.0 + 0.1 * jax.random.normal(ks[2], (32,), jnp.float32),
        "be1": 0.1 * jax.random.normal(ks[3], (32,), jnp.float32),
        "w2": conv_w(ks[4], 64, 32, 4, 4),
        "b2": 0.01 * jax.random.normal(ks[5], (64,), jnp.float32),   # cancelled by BN
        "g2": 1.0 + 0.1 * jax.random.normal(ks[6], (64,), jnp.float32),
        "be2": 0.1 * jax.random.normal(ks[7], (64,), jnp.float32),
        "w3": conv_w(ks[8], 128, 64, 4, 4),
        "b3": 0.01 * jax.random.normal(ks[9], (128,), jnp.float32),  # cancelled by BN
        "g3": 1.0 + 0.1 * jax.random.normal(ks[10], (128,), jnp.float32),
        "be3": 0.1 * jax.random.normal(ks[11], (128,), jnp.float32),
    }
    return params


@jax.jit
def cnn3_forward(x_nhwc, params):
    """x_nhwc: (N, H, W, 3) — the tensor fed to Cnn3.forward (which permutes to NCHW
    itself). Returns NCHW (N, 128, H/8, W/8) like the PyTorch module."""
    h = _conv_layer(x_nhwc, params["w1"], params["g1"], params["be1"])
    h = _conv_layer(h, params["w2"], params["g2"], params["be2"])
    h = _conv_layer(h, params["w3"], params["g3"], params["be3"])
    return jnp.transpose(h, (0, 3, 1, 2))  # NHWC -> NCHW


if __name__ == "__main__":
    key = jax.random.PRNGKey(0)
    kx, kp = jax.random.split(key)
    x = jax.random.normal(kx, (2, 16, 16, 3), jnp.float32)  # (N, H, W, C=3)
    params = init_params(kp)

    out = cnn3_forward(x, params)
    out = jax.block_until_ready(out)
    assert out.shape == (2, 128, 2, 2), out.shape
    assert bool(jnp.all(out >= 0.0))  # ReLU output
    assert bool(jnp.all(jnp.isfinite(out)))
    print("KERNEL_OK")
</pallas_src>

<mosaic_0001>
module attributes {stable_mosaic.version = 11 : i64} {
  func.func @_fused_layer_kernel(%arg0: i32, %arg1: memref<128x128xbf16, #tpu.memory_space<vmem>>, %arg2: memref<128x128xbf16, #tpu.memory_space<vmem>>, %arg3: memref<8x128xf32, #tpu.memory_space<vmem>>, %arg4: memref<128x128xf32, #tpu.memory_space<vmem>>) attributes {dimension_semantics = [#tpu.dimension_semantics<arbitrary>], iteration_bounds = array<i64: 1>, scalar_prefetch = 0 : i64, scratch_operands = 0 : i64, tpu.core_type = #tpu.core_type<tc>, window_params = [{pipeline_mode = #tpu.pipeline_mode<synchronous>, transform_indices = @transform_0, window_bounds = array<i64: 128, 128>}, {pipeline_mode = #tpu.pipeline_mode<synchronous>, transform_indices = @transform_1, window_bounds = array<i64: 128, 128>}, {pipeline_mode = #tpu.pipeline_mode<synchronous>, transform_indices = @transform_2, window_bounds = array<i64: 8, 128>}, {pipeline_mode = #tpu.pipeline_mode<synchronous>, transform_indices = @transform_3, window_bounds = array<i64: 128, 128>}]} {
    %c0 = arith.constant 0 : index
    %c0_0 = arith.constant 0 : index
    %0 = vector.load %arg1[%c0, %c0_0] : memref<128x128xbf16, #tpu.memory_space<vmem>>, vector<128x128xbf16>
    %c0_1 = arith.constant 0 : index
    %c0_2 = arith.constant 0 : index
    %1 = vector.load %arg2[%c0_1, %c0_2] : memref<128x128xbf16, #tpu.memory_space<vmem>>, vector<128x128xbf16>
    %cst = arith.constant dense<0.000000e+00> : vector<128x128xf32>
    %2 = tpu.matmul %0, %1, %cst {dimension_numbers = #tpu.dot_dimension_numbers<[1], [0], [0], [1], [0, 0, 1, 1], [], []>} : vector<128x128xbf16>, vector<128x128xbf16>, vector<128x128xf32> -> vector<128x128xf32>
    %cst_3 = arith.constant dense<0.000000e+00> : vector<128xf32>
    %3 = vector.multi_reduction <add>, %2, %cst_3 [0] : vector<128x128xf32> to vector<128xf32>
    %4 = vector.shape_cast %3 : vector<128xf32> to vector<1x128xf32>
    %5 = arith.mulf %2, %2 : vector<128x128xf32>
    %cst_4 = arith.constant dense<0.000000e+00> : vector<128xf32>
    %6 = vector.multi_reduction <add>, %5, %cst_4 [0] : vector<128x128xf32> to vector<128xf32>
    %7 = vector.shape_cast %6 : vector<128xf32> to vector<1x128xf32>
    %cst_5 = arith.constant 7.812500e-03 : f32
    %8 = vector.broadcast %cst_5 : f32 to vector<1x128xf32>
    %9 = arith.mulf %4, %8 : vector<1x128xf32>
    %cst_6 = arith.constant 7.812500e-03 : f32
    %10 = vector.broadcast %cst_6 : f32 to vector<1x128xf32>
    %11 = arith.mulf %7, %10 : vector<1x128xf32>
    %12 = arith.mulf %9, %9 : vector<1x128xf32>
    %13 = arith.subf %11, %12 : vector<1x128xf32>
    %cst_7 = arith.constant 0.000000e+00 : f32
    %14 = vector.broadcast %cst_7 : f32 to vector<1x128xf32>
    %15 = arith.maximumf %13, %14 : vector<1x128xf32>
    %c0_8 = arith.constant 0 : index
    %c0_9 = arith.constant 0 : index
    %16 = vector.load %arg3[%c0_8, %c0_9] : memref<8x128xf32, #tpu.memory_space<vmem>>, vector<1x128xf32>
    %c1 = arith.constant 1 : index
    %c0_10 = arith.constant 0 : index
    %17 = vector.load %arg3[%c1, %c0_10] : memref<8x128xf32, #tpu.memory_space<vmem>>, vector<1x128xf32>
    %cst_11 = arith.constant 9.99999974E-6 : f32
    %18 = vector.broadcast %cst_11 : f32 to vector<1x128xf32>
    %19 = arith.addf %15, %18 : vector<1x128xf32>
    %20 = math.rsqrt %19 : vector<1x128xf32>
    %21 = arith.mulf %16, %20 : vector<1x128xf32>
    %22 = arith.mulf %9, %21 : vector<1x128xf32>
    %23 = arith.subf %17, %22 : vector<1x128xf32>
    %24 = vector.broadcast %21 : vector<1x128xf32> to vector<128x128xf32>
    %25 = arith.mulf %2, %24 : vector<128x128xf32>
    %26 = vector.broadcast %23 : vector<1x128xf32> to vector<128x128xf32>
    %27 = arith.addf %25, %26 : vector<128x128xf32>
    %cst_12 = arith.constant 0.000000e+00 : f32
    %28 = vector.broadcast %cst_12 : f32 to vector<128x128xf32>
    %29 = arith.maximumf %27, %28 : vector<128x128xf32>
    %c0_13 = arith.constant 0 : index
    %c0_14 = arith.constant 0 : index
    %30 = vector.load %arg4[%c0_13, %c0_14] : memref<128x128xf32, #tpu.memory_space<vmem>>, vector<128x128xf32>
    tpu.vector_store %arg4[%c0_13, %c0_14], %29 {strides = array<i32>} : memref<128x128xf32, #tpu.memory_space<vmem>>, vector<128x128xf32>,
    return
  }
  func.func @transform_0(%arg0: i32) -> (i32, i32) {
    %c0_i32 = arith.constant 0 : i32
    %c0_i32_0 = arith.constant 0 : i32
    %c0_i32_1 = arith.constant 0 : i32
    return %c0_i32, %c0_i32_0 : i32, i32
  }
  func.func @transform_1(%arg0: i32) -> (i32, i32) {
    %c0_i32 = arith.constant 0 : i32
    %c0_i32_0 = arith.constant 0 : i32
    %c0_i32_1 = arith.constant 0 : i32
    return %c0_i32, %c0_i32_0 : i32, i32
  }
  func.func @transform_2(%arg0: i32) -> (i32, i32) {
    %c0_i32 = arith.constant 0 : i32
    %c0_i32_0 = arith.constant 0 : i32
    %c0_i32_1 = arith.constant 0 : i32
    return %c0_i32, %c0_i32_0 : i32, i32
  }
  func.func @transform_3(%arg0: i32) -> (i32, i32) {
    %c0_i32 = arith.constant 0 : i32
    %c0_i32_0 = arith.constant 0 : i32
    %c0_i32_1 = arith.constant 0 : i32
    return %c0_i32, %c0_i32_0 : i32, i32
  }
}

module attributes {stable_mosaic.version = 11 : i64} {
  func.func @_fused_layer_kernel(%arg0: i32, %arg1: memref<32x512xbf16, #tpu.memory_space<vmem>>, %arg2: memref<512x128xbf16, #tpu.memory_space<vmem>>, %arg3: memref<8x128xf32, #tpu.memory_space<vmem>>, %arg4: memref<32x128xf32, #tpu.memory_space<vmem>>) attributes {dimension_semantics = [#tpu.dimension_semantics<arbitrary>], iteration_bounds = array<i64: 1>, scalar_prefetch = 0 : i64, scratch_operands = 0 : i64, tpu.core_type = #tpu.core_type<tc>, window_params = [{pipeline_mode = #tpu.pipeline_mode<synchronous>, transform_indices = @transform_0, window_bounds = array<i64: 32, 512>}, {pipeline_mode = #tpu.pipeline_mode<synchronous>, transform_indices = @transform_1, window_bounds = array<i64: 512, 128>}, {pipeline_mode = #tpu.pipeline_mode<synchronous>, transform_indices = @transform_2, window_bounds = array<i64: 8, 128>}, {pipeline_mode = #tpu.pipeline_mode<synchronous>, transform_indices = @transform_3, window_bounds = array<i64: 32, 128>}]} {
    %c0 = arith.constant 0 : index
    %c0_0 = arith.constant 0 : index
    %0 = vector.load %arg1[%c0, %c0_0] : memref<32x512xbf16, #tpu.memory_space<vmem>>, vector<32x512xbf16>
    %c0_1 = arith.constant 0 : index
    %c0_2 = arith.constant 0 : index
    %1 = vector.load %arg2[%c0_1, %c0_2] : memref<512x128xbf16, #tpu.memory_space<vmem>>, vector<512x128xbf16>
    %cst = arith.constant dense<0.000000e+00> : vector<32x128xf32>
    %2 = tpu.matmul %0, %1, %cst {dimension_numbers = #tpu.dot_dimension_numbers<[1], [0], [0], [1], [0, 0, 1, 1], [], []>} : vector<32x512xbf16>, vector<512x128xbf16>, vector<32x128xf32> -> vector<32x128xf32>
    %cst_3 = arith.constant dense<0.000000e+00> : vector<128xf32>
    %3 = vector.multi_reduction <add>, %2, %cst_3 [0] : vector<32x128xf32> to vector<128xf32>
    %4 = vector.shape_cast %3 : vector<128xf32> to vector<1x128xf32>
    %5 = arith.mulf %2, %2 : vector<32x128xf32>
    %cst_4 = arith.constant dense<0.000000e+00> : vector<128xf32>
    %6 = vector.multi_reduction <add>, %5, %cst_4 [0] : vector<32x128xf32> to vector<128xf32>
    %7 = vector.shape_cast %6 : vector<128xf32> to vector<1x128xf32>
    %cst_5 = arith.constant 3.125000e-02 : f32
    %8 = vector.broadcast %cst_5 : f32 to vector<1x128xf32>
    %9 = arith.mulf %4, %8 : vector<1x128xf32>
    %cst_6 = arith.constant 3.125000e-02 : f32
    %10 = vector.broadcast %cst_6 : f32 to vector<1x128xf32>
    %11 = arith.mulf %7, %10 : vector<1x128xf32>
    %12 = arith.mulf %9, %9 : vector<1x128xf32>
    %13 = arith.subf %11, %12 : vector<1x128xf32>
    %cst_7 = arith.constant 0.000000e+00 : f32
    %14 = vector.broadcast %cst_7 : f32 to vector<1x128xf32>
    %15 = arith.maximumf %13, %14 : vector<1x128xf32>
    %c0_8 = arith.constant 0 : index
    %c0_9 = arith.constant 0 : index
    %16 = vector.load %arg3[%c0_8, %c0_9] : memref<8x128xf32, #tpu.memory_space<vmem>>, vector<1x128xf32>
    %c1 = arith.constant 1 : index
    %c0_10 = arith.constant 0 : index
    %17 = vector.load %arg3[%c1, %c0_10] : memref<8x128xf32, #tpu.memory_space<vmem>>, vector<1x128xf32>
    %cst_11 = arith.constant 9.99999974E-6 : f32
    %18 = vector.broadcast %cst_11 : f32 to vector<1x128xf32>
    %19 = arith.addf %15, %18 : vector<1x128xf32>
    %20 = math.rsqrt %19 : vector<1x128xf32>
    %21 = arith.mulf %16, %20 : vector<1x128xf32>
    %22 = arith.mulf %9, %21 : vector<1x128xf32>
    %23 = arith.subf %17, %22 : vector<1x128xf32>
    %24 = vector.broadcast %21 : vector<1x128xf32> to vector<32x128xf32>
    %25 = arith.mulf %2, %24 : vector<32x128xf32>
    %26 = vector.broadcast %23 : vector<1x128xf32> to vector<32x128xf32>
    %27 = arith.addf %25, %26 : vector<32x128xf32>
    %cst_12 = arith.constant 0.000000e+00 : f32
    %28 = vector.broadcast %cst_12 : f32 to vector<32x128xf32>
    %29 = arith.maximumf %27, %28 : vector<32x128xf32>
    %c0_13 = arith.constant 0 : index
    %c0_14 = arith.constant 0 : index
    %30 = vector.load %arg4[%c0_13, %c0_14] : memref<32x128xf32, #tpu.memory_space<vmem>>, vector<32x128xf32>
    tpu.vector_store %arg4[%c0_13, %c0_14], %29 {strides = array<i32>} : memref<32x128xf32, #tpu.memory_space<vmem>>, vector<32x128xf32>,
    return
  }
  func.func @transform_0(%arg0: i32) -> (i32, i32) {
    %c0_i32 = arith.constant 0 : i32
    %c0_i32_0 = arith.constant 0 : i32
    %c0_i32_1 = arith.constant 0 : i32
    return %c0_i32, %c0_i32_0 : i32, i32
  }
  func.func @transform_1(%arg0: i32) -> (i32, i32) {
    %c0_i32 = arith.constant 0 : i32
    %c0_i32_0 = arith.constant 0 : i32
    %c0_i32_1 = arith.constant 0 : i32
    return %c0_i32, %c0_i32_0 : i32, i32
  }
  func.func @transform_2(%arg0: i32) -> (i32, i32) {
    %c0_i32 = arith.constant 0 : i32
    %c0_i32_0 = arith.constant 0 : i32
    %c0_i32_1 = arith.constant 0 : i32
    return %c0_i32, %c0_i32_0 : i32, i32
  }
  func.func @transform_3(%arg0: i32) -> (i32, i32) {
    %c0_i32 = arith.constant 0 : i32
    %c0_i32_0 = arith.constant 0 : i32
    %c0_i32_1 = arith.constant 0 : i32
    return %c0_i32, %c0_i32_0 : i32, i32
  }
}

module attributes {stable_mosaic.version = 11 : i64} {
  func.func @_fused_layer_kernel(%arg0: i32, %arg1: memref<8x1024xbf16, #tpu.memory_space<vmem>>, %arg2: memref<1024x128xbf16, #tpu.memory_space<vmem>>, %arg3: memref<8x128xf32, #tpu.memory_space<vmem>>, %arg4: memref<8x128xf32, #tpu.memory_space<vmem>>) attributes {dimension_semantics = [#tpu.dimension_semantics<arbitrary>], iteration_bounds = array<i64: 1>, scalar_prefetch = 0 : i64, scratch_operands = 0 : i64, tpu.core_type = #tpu.core_type<tc>, window_params = [{pipeline_mode = #tpu.pipeline_mode<synchronous>, transform_indices = @transform_0, window_bounds = array<i64: 8, 1024>}, {pipeline_mode = #tpu.pipeline_mode<synchronous>, transform_indices = @transform_1, window_bounds = array<i64: 1024, 128>}, {pipeline_mode = #tpu.pipeline_mode<synchronous>, transform_indices = @transform_2, window_bounds = array<i64: 8, 128>}, {pipeline_mode = #tpu.pipeline_mode<synchronous>, transform_indices = @transform_3, window_bounds = array<i64: 8, 128>}]} {
    %c0 = arith.constant 0 : index
    %c0_0 = arith.constant 0 : index
    %0 = vector.load %arg1[%c0, %c0_0] : memref<8x1024xbf16, #tpu.memory_space<vmem>>, vector<8x1024xbf16>
    %c0_1 = arith.constant 0 : index
    %c0_2 = arith.constant 0 : index
    %1 = vector.load %arg2[%c0_1, %c0_2] : memref<1024x128xbf16, #tpu.memory_space<vmem>>, vector<1024x128xbf16>
    %cst = arith.constant dense<0.000000e+00> : vector<8x128xf32>
    %2 = tpu.matmul %0, %1, %cst {dimension_numbers = #tpu.dot_dimension_numbers<[1], [0], [0], [1], [0, 0, 1, 1], [], []>} : vector<8x1024xbf16>, vector<1024x128xbf16>, vector<8x128xf32> -> vector<8x128xf32>
    %cst_3 = arith.constant dense<0.000000e+00> : vector<128xf32>
    %3 = vector.multi_reduction <add>, %2, %cst_3 [0] : vector<8x128xf32> to vector<128xf32>
    %4 = vector.shape_cast %3 : vector<128xf32> to vector<1x128xf32>
    %5 = arith.mulf %2, %2 : vector<8x128xf32>
    %cst_4 = arith.constant dense<0.000000e+00> : vector<128xf32>
    %6 = vector.multi_reduction <add>, %5, %cst_4 [0] : vector<8x128xf32> to vector<128xf32>
    %7 = vector.shape_cast %6 : vector<128xf32> to vector<1x128xf32>
    %cst_5 = arith.constant 1.250000e-01 : f32
    %8 = vector.broadcast %cst_5 : f32 to vector<1x128xf32>
    %9 = arith.mulf %4, %8 : vector<1x128xf32>
    %cst_6 = arith.constant 1.250000e-01 : f32
    %10 = vector.broadcast %cst_6 : f32 to vector<1x128xf32>
    %11 = arith.mulf %7, %10 : vector<1x128xf32>
    %12 = arith.mulf %9, %9 : vector<1x128xf32>
    %13 = arith.subf %11, %12 : vector<1x128xf32>
    %cst_7 = arith.constant 0.000000e+00 : f32
    %14 = vector.broadcast %cst_7 : f32 to vector<1x128xf32>
    %15 = arith.maximumf %13, %14 : vector<1x128xf32>
    %c0_8 = arith.constant 0 : index
    %c0_9 = arith.constant 0 : index
    %16 = vector.load %arg3[%c0_8, %c0_9] : memref<8x128xf32, #tpu.memory_space<vmem>>, vector<1x128xf32>
    %c1 = arith.constant 1 : index
    %c0_10 = arith.constant 0 : index
    %17 = vector.load %arg3[%c1, %c0_10] : memref<8x128xf32, #tpu.memory_space<vmem>>, vector<1x128xf32>
    %cst_11 = arith.constant 9.99999974E-6 : f32
    %18 = vector.broadcast %cst_11 : f32 to vector<1x128xf32>
    %19 = arith.addf %15, %18 : vector<1x128xf32>
    %20 = math.rsqrt %19 : vector<1x128xf32>
    %21 = arith.mulf %16, %20 : vector<1x128xf32>
    %22 = arith.mulf %9, %21 : vector<1x128xf32>
    %23 = arith.subf %17, %22 : vector<1x128xf32>
    %24 = vector.broadcast %21 : vector<1x128xf32> to vector<8x128xf32>
    %25 = arith.mulf %2, %24 : vector<8x128xf32>
    %26 = vector.broadcast %23 : vector<1x128xf32> to vector<8x128xf32>
    %27 = arith.addf %25, %26 : vector<8x128xf32>
    %cst_12 = arith.constant 0.000000e+00 : f32
    %28 = vector.broadcast %cst_12 : f32 to vector<8x128xf32>
    %29 = arith.maximumf %27, %28 : vector<8x128xf32>
    %c0_13 = arith.constant 0 : index
    %c0_14 = arith.constant 0 : index
    %30 = vector.load %arg4[%c0_13, %c0_14] : memref<8x128xf32, #tpu.memory_space<vmem>>, vector<8x128xf32>
    tpu.vector_store %arg4[%c0_13, %c0_14], %29 {strides = array<i32>} : memref<8x128xf32, #tpu.memory_space<vmem>>, vector<8x128xf32>,
    return
  }
  func.func @transform_0(%arg0: i32) -> (i32, i32) {
    %c0_i32 = arith.constant 0 : i32
    %c0_i32_0 = arith.constant 0 : i32
    %c0_i32_1 = arith.constant 0 : i32
    return %c0_i32, %c0_i32_0 : i32, i32
  }
  func.func @transform_1(%arg0: i32) -> (i32, i32) {
    %c0_i32 = arith.constant 0 : i32
    %c0_i32_0 = arith.constant 0 : i32
    %c0_i32_1 = arith.constant 0 : i32
    return %c0_i32, %c0_i32_0 : i32, i32
  }
  func.func @transform_2(%arg0: i32) -> (i32, i32) {
    %c0_i32 = arith.constant 0 : i32
    %c0_i32_0 = arith.constant 0 : i32
    %c0_i32_1 = arith.constant 0 : i32
    return %c0_i32, %c0_i32_0 : i32, i32
  }
  func.func @transform_3(%arg0: i32) -> (i32, i32) {
    %c0_i32 = arith.constant 0 : i32
    %c0_i32_0 = arith.constant 0 : i32
    %c0_i32_1 = arith.constant 0 : i32
    return %c0_i32, %c0_i32_0 : i32, i32
  }
}

</mosaic_0001>

<llo_original>
// kernel: cnn3_forward.3
$region0: #{cnn3_forward.3}
  #allocation0 [shape = 'u32[]', space=smem, size = 0x4, offset = 0x4, fixed_abs, tag = 'smem constant byte address 0x4 - core index']
  #allocation1 [shape = 'u32[144,128]{1,0:T(1,128)}', space=vmem, size = 0x12000, scoped, tag = 'internal scratch']
  %s0 = inlined_call_operand.vmem [shape: bf16[128,128], index: 0, kind: input, shape index: {}]
  %s1 = inlined_call_operand.vmem [shape: bf16[128,128], index: 1, kind: input, shape index: {}]
  %s2 = inlined_call_operand.vmem [shape: f32[8,128], index: 2, kind: input, shape index: {}]
  %s3 = inlined_call_operand.vmem [shape: f32[128,128], index: 3, kind: output, shape index: {}]
  %s4 = sld [smem:[#allocation0]]
  $region22: #{cnn3_forward.3} parent=0
    _
  %s6 = ssub.s32 1, %s4
  %s7 = scalar_select 0, %s6, %s4
  // Predicated region
  $region2: #{cnn3_forward.3} parent=0 // pred_check
    _
  $region3: #{cnn3_forward.3} parent=0 // pred_check_branch
    %9 = sbr.rel (0) target = $region5
  $region4: #{cnn3_forward.3} parent=0 // pred_region
    _
  $region5: #{cnn3_forward.3} parent=0 // pred_fallthru
    _
  // Predicated region
  $region6: #{cnn3_forward.3} parent=0 // pred_check
    _
  $region7: #{cnn3_forward.3} parent=0 // pred_check_branch
    %11 = sbr.rel (0) target = $region9
  $region8: #{cnn3_forward.3} parent=0 // pred_region
    _
  $region9: #{cnn3_forward.3} parent=0 // pred_fallthru
    _
  // Predicated region
  $region10: #{cnn3_forward.3} parent=0 // pred_check
    _
  $region11: #{cnn3_forward.3} parent=0 // pred_check_branch
    %13 = sbr.rel (0) target = $region13
  $region12: #{cnn3_forward.3} parent=0 // pred_region
    _
  $region13: #{cnn3_forward.3} parent=0 // pred_fallthru
    _
  %v15 = vld [vmem:[%s0] sm:$0xf]
  %v16 = vld [vmem:[%s0 + $0x4] sm:$0xf]
  %v17 = vld [vmem:[%s0 + $0x8] sm:$0xf]
  %v18 = vld [vmem:[%s0 + $0xc] sm:$0xf]
  %v19 = vld [vmem:[%s0 + $0x10] sm:$0xf]
  %v20 = vld [vmem:[%s0 + $0x14] sm:$0xf]
  %v21 = vld [vmem:[%s0 + $0x18] sm:$0xf]
  %v22 = vld [vmem:[%s0 + $0x1c] sm:$0xf]
  %v23 = vld [vmem:[%s0 + $0x20] sm:$0xf]
  %v24 = vld [vmem:[%s0 + $0x24] sm:$0xf]
  %v25 = vld [vmem:[%s0 + $0x28] sm:$0xf]
  %v26 = vld [vmem:[%s0 + $0x2c] sm:$0xf]
  %v27 = vld [vmem:[%s0 + $0x30] sm:$0xf]
  %v28 = vld [vmem:[%s0 + $0x34] sm:$0xf]
  %v29 = vld [vmem:[%s0 + $0x38] sm:$0xf]
  %v30 = vld [vmem:[%s0 + $0x3c] sm:$0xf]
  %v31 = vld [vmem:[%s1] sm:$0xf]
  %v32 = vld [vmem:[%s1 + $0x4] sm:$0xf]
  %v33 = vld [vmem:[%s1 + $0x8] sm:$0xf]
  %v34 = vld [vmem:[%s1 + $0xc] sm:$0xf]
  %v35 = vld [vmem:[%s1 + $0x10] sm:$0xf]
  %v36 = vld [vmem:[%s1 + $0x14] sm:$0xf]
  %v37 = vld [vmem:[%s1 + $0x18] sm:$0xf]
  %v38 = vld [vmem:[%s1 + $0x1c] sm:$0xf]
  %v39 = vld [vmem:[%s1 + $0x20] sm:$0xf]
  %v40 = vld [vmem:[%s1 + $0x24] sm:$0xf]
  %v41 = vld [vmem:[%s1 + $0x28] sm:$0xf]
  %v42 = vld [vmem:[%s1 + $0x2c] sm:$0xf]
  %v43 = vld [vmem:[%s1 + $0x30] sm:$0xf]
  %v44 = vld [vmem:[%s1 + $0x34] sm:$0xf]
  %v45 = vld [vmem:[%s1 + $0x38] sm:$0xf]
  %v46 = vld [vmem:[%s1 + $0x3c] sm:$0xf]
  %v63 = vunpack.c.l.b16 %v15
  %v64 = vunpack.c.l.b16 %v16
  %v65 = vunpack.c.l.b16 %v17
  %v66 = vunpack.c.l.b16 %v18
  %v67 = vunpack.c.l.b16 %v19
  %v68 = vunpack.c.l.b16 %v20
  %v69 = vunpack.c.l.b16 %v21
  %v70 = vunpack.c.l.b16 %v22
  %v71 = vunpack.c.l.b16 %v23
  %v72 = vunpack.c.l.b16 %v24
  %v73 = vunpack.c.l.b16 %v25
  %v74 = vunpack.c.l.b16 %v26
  %v75 = vunpack.c.l.b16 %v27
  %v76 = vunpack.c.l.b16 %v28
  %v77 = vunpack.c.l.b16 %v29
  %v78 = vunpack.c.l.b16 %v30
  %v79 = vpack.c.b16 %v64, %v63
  %v80 = vpack.c.b16 %v66, %v65
  %v81 = vpack.c.b16 %v68, %v67
  %v82 = vpack.c.b16 %v70, %v69
  %v83 = vpack.c.b16 %v72, %v71
  %v84 = vpack.c.b16 %v74, %v73
  %v85 = vpack.c.b16 %v76, %v75
  %v86 = vpack.c.b16 %v78, %v77
  %v111 = vunpack.c.l.b16 %v31
  %v112 = vunpack.c.l.b16 %v32
  %v113 = vunpack.c.l.b16 %v33
  %v114 = vunpack.c.l.b16 %v34
  %v115 = vunpack.c.l.b16 %v35
  %v116 = vunpack.c.l.b16 %v36
  %v117 = vunpack.c.l.b16 %v37
  %v118 = vunpack.c.l.b16 %v38
  %v119 = vunpack.c.l.b16 %v39
  %v120 = vunpack.c.l.b16 %v40
  %v121 = vunpack.c.l.b16 %v41
  %v122 = vunpack.c.l.b16 %v42
  %v123 = vunpack.c.l.b16 %v43
  %v124 = vunpack.c.l.b16 %v44
  %v125 = vunpack.c.l.b16 %v45
  %v126 = vunpack.c.l.b16 %v46
  %v127 = vpack.c.b16 %v112, %v111
  %v128 = vpack.c.b16 %v114, %v113
  %v129 = vpack.c.b16 %v116, %v115
  %v130 = vpack.c.b16 %v118, %v117
  %v131 = vpack.c.b16 %v120, %v119
  %v132 = vpack.c.b16 %v122, %v121
  %v133 = vpack.c.b16 %v124, %v123
  %v134 = vpack.c.b16 %v126, %v125
  %143 = vmatprep.subr.bf16.mxu0 0
  %144 = vmatpush1.bf16.msra.mxu0 %v127
  %145 = vmatprep.subr.bf16.mxu0 0
  %146 = vmatpush1.bf16.msra.mxu0 %v128
  %147 = vmatprep.subr.bf16.mxu0 0
  %148 = vmatpush1.bf16.msra.mxu0 %v129
  %149 = vmatprep.subr.bf16.mxu0 0
  %150 = vmatpush1.bf16.msra.mxu0 %v130
  %151 = vmatprep.subr.bf16.mxu0 0
  %152 = vmatpush1.bf16.msra.mxu0 %v131
  %153 = vmatprep.subr.bf16.mxu0 0
  %154 = vmatpush1.bf16.msra.mxu0 %v132
  %155 = vmatprep.subr.bf16.mxu0 0
  %156 = vmatpush1.bf16.msra.mxu0 %v133
  %157 = vmatprep.subr.bf16.mxu0 0
  %158 = vmatpush1.bf16.msra.mxu0 %v134
  %159 = vmatprep.subr.bf16.mxu0 0
  %160 = vmatpush1.bf16.msra.mxu0 0
  %161 = vmatprep.subr.bf16.mxu0 0
  %162 = vmatpush1.bf16.msra.mxu0 0
  %163 = vmatprep.subr.bf16.mxu0 0
  %164 = vmatpush1.bf16.msra.mxu0 0
  %165 = vmatprep.subr.bf16.mxu0 0
  %166 = vmatpush1.bf16.msra.mxu0 0
  %167 = vmatprep.subr.bf16.mxu0 0
  %168 = vmatpush1.bf16.msra.mxu0 0
  %169 = vmatprep.subr.bf16.mxu0 0
  %170 = vmatpush1.bf16.msra.mxu0 0
  %171 = vmatprep.subr.bf16.mxu0 0
  %172 = vmatpush1.bf16.msra.mxu0 0
  %173 = vmatprep.subr.bf16.mxu0 0
  %174 = vmatpush1.bf16.msra.mxu0 0
  %175 = vmatprep.mubr.bf16.mxu0 0
  %176 = vmatmul.mubr.bf16.gmra.mrb[0].mxu0 %v79
  %v177 = vpop.f32.mrb[0].mxu0
  %v178 = vadd.f32 0.0, %v177
  %v179 = vpop.f32.mrb[0].mxu0
  %v180 = vpop.f32.mrb[0].mxu0
  %v181 = vadd.f32 0.0, %v180
  %v182 = vpop.f32.mrb[0].mxu0
  %183 = vmatprep.mubr.bf16.mxu0 0
  %184 = vmatmul.mubr.bf16.gmra.mrb[0].mxu0 %v80
  %v185 = vpop.f32.mrb[0].mxu0
  %v186 = vadd.f32 0.0, %v185
  %v187 = vpop.f32.mrb[0].mxu0
  %v188 = vpop.f32.mrb[0].mxu0
  %v189 = vadd.f32 0.0, %v188
  %v190 = vpop.f32.mrb[0].mxu0
  %191 = vmatprep.mubr.bf16.mxu0 0
  %192 = vmatmul.mubr.bf16.gmra.mrb[0].mxu0 %v81
  %v193 = vpop.f32.mrb[0].mxu0
  %v194 = vadd.f32 0.0, %v193
  %v195 = vpop.f32.mrb[0].mxu0
  %v196 = vpop.f32.mrb[0].mxu0
  %v197 = vadd.f32 0.0, %v196
  %v198 = vpop.f32.mrb[0].mxu0
  %199 = vmatprep.mubr.bf16.mxu0 0
  %200 = vmatmul.mubr.bf16.gmra.mrb[0].mxu0 %v82
  %v201 = vpop.f32.mrb[0].mxu0
  %v202 = vadd.f32 0.0, %v201
  %v203 = vpop.f32.mrb[0].mxu0
  %v204 = vpop.f32.mrb[0].mxu0
  %v205 = vadd.f32 0.0, %v204
  %v206 = vpop.f32.mrb[0].mxu0
  %207 = vmatprep.mubr.bf16.mxu0 0
  %208 = vmatmul.mubr.bf16.gmra.mrb[0].mxu0 %v83
  %v209 = vpop.f32.mrb[0].mxu0
  %v210 = vadd.f32 0.0, %v209
  %v211 = vpop.f32.mrb[0].mxu0
  %v212 = vpop.f32.mrb[0].mxu0
  %v213 = vadd.f32 0.0, %v212
  %v214 = vpop.f32.mrb[0].mxu0
  %215 = vmatprep.mubr.bf16.mxu0 0
  %216 = vmatmul.mubr.bf16.gmra.mrb[0].mxu0 %v84
  %v217 = vpop.f32.mrb[0].mxu0
  %v218 = vadd.f32 0.0, %v217
  %v219 = vpop.f32.mrb[0].mxu0
  %v220 = vpop.f32.mrb[0].mxu0
  %v221 = vadd.f32 0.0, %v220
  %v222 = vpop.f32.mrb[0].mxu0
  %223 = vmatprep.mubr.bf16.mxu0 0
  %224 = vmatmul.mubr.bf16.gmra.mrb[0].mxu0 %v85
  %v225 = vpop.f32.mrb[0].mxu0
  %v226 = vadd.f32 0.0, %v225
  %v227 = vpop.f32.mrb[0].mxu0
  %v228 = vpop.f32.mrb[0].mxu0
  %v229 = vadd.f32 0.0, %v228
  %v230 = vpop.f32.mrb[0].mxu0
  %231 = vmatprep.mubr.bf16.mxu0 0
  %232 = vmatmul.mubr.bf16.gmra.mrb[0].mxu0 %v86
  %v233 = vpop.f32.mrb[0].mxu0
  %v234 = vadd.f32 0.0, %v233
  %v235 = vpop.f32.mrb[0].mxu0
  %v236 = vpop.f32.mrb[0].mxu0
  %v237 = vadd.f32 0.0, %v236
  %v238 = vpop.f32.mrb[0].mxu0
  %239 = vdwg.mxu0
  %v240 = vadd.f32 %v178, %v181
  %v241 = vadd.f32 %v240, %v186
  %v242 = vadd.f32 %v241, %v189
  %v243 = vadd.f32 %v242, %v194
  %v244 = vadd.f32 %v243, %v197
  %v245 = vadd.f32 %v244, %v202
  %v246 = vadd.f32 %v245, %v205
  %v247 = vadd.f32 %v246, %v210
  %v248 = vadd.f32 %v247, %v213
  %v249 = vadd.f32 %v248, %v218
  %v250 = vadd.f32 %v249, %v221
  %v251 = vadd.f32 %v250, %v226
  %v252 = vadd.f32 %v251, %v229
  %v253 = vadd.f32 %v252, %v234
  %v254 = vadd.f32 %v253, %v237
  %v255 = vrot.slane %v254, 4
  %v256 = vadd.f32 %v254, %v255
  %v257 = vrot.slane %v256, 2
  %v258 = vadd.f32 %v256, %v257
  %v259 = vrot.slane %v258, 1
  %v260 = vadd.f32 %v258, %v259
  %v261 = vmul.f32 %v178, %v178
  %v262 = vmul.f32 %v181, %v181
  %v263 = vmul.f32 %v186, %v186
  %v264 = vmul.f32 %v189, %v189
  %v265 = vmul.f32 %v194, %v194
  %v266 = vmul.f32 %v197, %v197
  %v267 = vmul.f32 %v202, %v202
  %v268 = vmul.f32 %v205, %v205
  %v269 = vmul.f32 %v210, %v210
  %v270 = vmul.f32 %v213, %v213
  %v271 = vmul.f32 %v218, %v218
  %v272 = vmul.f32 %v221, %v221
  %v273 = vmul.f32 %v226, %v226
  %v274 = vmul.f32 %v229, %v229
  %v275 = vmul.f32 %v234, %v234
  %v276 = vmul.f32 %v237, %v237
  %v277 = vadd.f32 %v261, %v262
  %v278 = vadd.f32 %v277, %v263
  %v279 = vadd.f32 %v278, %v264
  %v280 = vadd.f32 %v279, %v265
  %v281 = vadd.f32 %v280, %v266
  %v282 = vadd.f32 %v281, %v267
  %v283 = vadd.f32 %v282, %v268
  %v284 = vadd.f32 %v283, %v269
  %v285 = vadd.f32 %v284, %v270
  %v286 = vadd.f32 %v285, %v271
  %v287 = vadd.f32 %v286, %v272
  %v288 = vadd.f32 %v287, %v273
  %v289 = vadd.f32 %v288, %v274
  %v290 = vadd.f32 %v289, %v275
  %v291 = vadd.f32 %v290, %v276
  %v292 = vrot.slane %v291, 4
  %v293 = vadd.f32 %v291, %v292
  %v294 = vrot.slane %v293, 2
  %v295 = vadd.f32 %v293, %v294
  %v296 = vrot.slane %v295, 1
  %v297 = vadd.f32 %v295, %v296
  %v298 = vmul.f32 %v260, 0.0078125
  %v299 = vmul.f32 %v297, 0.0078125
  %v300 = vmul.f32 %v298, %v298
  %v301 = vsub.f32 %v299, %v300
  %v302 = vmax.f32 %v301, 0.0
  %v303 = vld [vmem:[%s2] sm:$0x1]
  %v304 = vld [vmem:[%s2 + $0x1] sm:$0x1]
  %v305 = vadd.f32 %v302, 1e-05
  %v306 = vrsqrt.pop %v305
  %v307 = vmul.f32 %v303, %v306
  %v308 = vmul.f32 %v298, %v307
  %v309 = vsub.f32 %v304, %v308
  %v310 = vlaneseq
  %v311 = vshrl.u32 %v310, 7
  %v312 = vsub.s32 0, %v311
  %v313 = vrot.slane %v307, %v312
  %v314 = vmul.f32 %v178, %v313
  %v315 = vmul.f32 %v181, %v313
  %v316 = vmul.f32 %v186, %v313
  %v317 = vmul.f32 %v189, %v313
  %v318 = vmul.f32 %v194, %v313
  %v319 = vmul.f32 %v197, %v313
  %v320 = vmul.f32 %v202, %v313
  %v321 = vmul.f32 %v205, %v313
  %v322 = vmul.f32 %v210, %v313
  %v323 = vmul.f32 %v213, %v313
  %v324 = vmul.f32 %v218, %v313
  %v325 = vmul.f32 %v221, %v313
  %v326 = vmul.f32 %v226, %v313
  %v327 = vmul.f32 %v229, %v313
  %v328 = vmul.f32 %v234, %v313
  %v329 = vmul.f32 %v237, %v313
  %v330 = vlaneseq
  %v331 = vshrl.u32 %v330, 7
  %v332 = vsub.s32 0, %v331
  %v333 = vrot.slane %v309, %v332
  %v334 = vadd.f32 %v314, %v333
  %v335 = vadd.f32 %v315, %v333
  %v336 = vadd.f32 %v316, %v333
  %v337 = vadd.f32 %v317, %v333
  %v338 = vadd.f32 %v318, %v333
  %v339 = vadd.f32 %v319, %v333
  %v340 = vadd.f32 %v320, %v333
  %v341 = vadd.f32 %v321, %v333
  %v342 = vadd.f32 %v322, %v333
  %v343 = vadd.f32 %v323, %v333
  %v344 = vadd.f32 %v324, %v333
  %v345 = vadd.f32 %v325, %v333
  %v346 = vadd.f32 %v326, %v333
  %v347 = vadd.f32 %v327, %v333
  %v348 = vadd.f32 %v328, %v333
  %v349 = vadd.f32 %v329, %v333
  %v350 = vmax.f32 %v334, 0.0
  %v351 = vmax.f32 %v335, 0.0
  %v352 = vmax.f32 %v336, 0.0
  %v353 = vmax.f32 %v337, 0.0
  %v354 = vmax.f32 %v338, 0.0
  %v355 = vmax.f32 %v339, 0.0
  %v356 = vmax.f32 %v340, 0.0
  %v357 = vmax.f32 %v341, 0.0
  %v358 = vmax.f32 %v342, 0.0
  %v359 = vmax.f32 %v343, 0.0
  %v360 = vmax.f32 %v344, 0.0
  %v361 = vmax.f32 %v345, 0.0
  %v362 = vmax.f32 %v346, 0.0
  %v363 = vmax.f32 %v347, 0.0
  %v364 = vmax.f32 %v348, 0.0
  %v365 = vmax.f32 %v349, 0.0
  %366 = vst [vmem:[%s3] sm:$0xff] %v350
  %367 = vst [vmem:[%s3 + $0x8] sm:$0xff] %v351
  %368 = vst [vmem:[%s3 + $0x10] sm:$0xff] %v352
  %369 = vst [vmem:[%s3 + $0x18] sm:$0xff] %v353
  %370 = vst [vmem:[%s3 + $0x20] sm:$0xff] %v354
  %371 = vst [vmem:[%s3 + $0x28] sm:$0xff] %v355
  %372 = vst [vmem:[%s3 + $0x30] sm:$0xff] %v356
  %373 = vst [vmem:[%s3 + $0x38] sm:$0xff] %v357
  %374 = vst [vmem:[%s3 + $0x40] sm:$0xff] %v358
  %375 = vst [vmem:[%s3 + $0x48] sm:$0xff] %v359
  %376 = vst [vmem:[%s3 + $0x50] sm:$0xff] %v360
  %377 = vst [vmem:[%s3 + $0x58] sm:$0xff] %v361
  %378 = vst [vmem:[%s3 + $0x60] sm:$0xff] %v362
  %379 = vst [vmem:[%s3 + $0x68] sm:$0xff] %v363
  %380 = vst [vmem:[%s3 + $0x70] sm:$0xff] %v364
  %381 = vst [vmem:[%s3 + $0x78] sm:$0xff] %v365
  // Predicated region
  $region14: #{cnn3_forward.3} parent=0 // pred_check
    _
  $region15: #{cnn3_forward.3} parent=0 // pred_check_branch
    %383 = sbr.rel (0) target = $region17
  $region16: #{cnn3_forward.3} parent=0 // pred_region
    _
  $region17: #{cnn3_forward.3} parent=0 // pred_fallthru
    _
  // Predicated region
  $region18: #{cnn3_forward.3} parent=0 // pred_check
    _
  $region19: #{cnn3_forward.3} parent=0 // pred_check_branch
    %385 = sbr.rel (0) target = $region21
  $region20: #{cnn3_forward.3} parent=0 // pred_region
    _
  $region21: #{cnn3_forward.3} parent=0 // pred_fallthru
    _

// kernel: cnn3_forward.4
$region0: #{cnn3_forward.4}
  #allocation0 [shape = 'u32[]', space=smem, size = 0x4, offset = 0x4, fixed_abs, tag = 'smem constant byte address 0x4 - core index']
  #allocation1 [shape = 'u32[144,128]{1,0:T(1,128)}', space=vmem, size = 0x12000, scoped, tag = 'internal scratch']
  %s0 = inlined_call_operand.vmem [shape: bf16[32,512], index: 0, kind: input, shape index: {}]
  %s1 = inlined_call_operand.vmem [shape: bf16[512,128], index: 1, kind: input, shape index: {}]
  %s2 = inlined_call_operand.vmem [shape: f32[8,128], index: 2, kind: input, shape index: {}]
  %s3 = inlined_call_operand.vmem [shape: f32[32,128], index: 3, kind: output, shape index: {}]
  %s4 = sld [smem:[#allocation0]]
  $region22: #{cnn3_forward.4} parent=0
    _
  %s6 = ssub.s32 1, %s4
  %s7 = scalar_select 0, %s6, %s4
  // Predicated region
  $region2: #{cnn3_forward.4} parent=0 // pred_check
    _
  $region3: #{cnn3_forward.4} parent=0 // pred_check_branch
    %9 = sbr.rel (0) target = $region5
  $region4: #{cnn3_forward.4} parent=0 // pred_region
    _
  $region5: #{cnn3_forward.4} parent=0 // pred_fallthru
    _
  // Predicated region
  $region6: #{cnn3_forward.4} parent=0 // pred_check
    _
  $region7: #{cnn3_forward.4} parent=0 // pred_check_branch
    %11 = sbr.rel (0) target = $region9
  $region8: #{cnn3_forward.4} parent=0 // pred_region
    _
  $region9: #{cnn3_forward.4} parent=0 // pred_fallthru
    _
  // Predicated region
  $region10: #{cnn3_forward.4} parent=0 // pred_check
    _
  $region11: #{cnn3_forward.4} parent=0 // pred_check_branch
    %13 = sbr.rel (0) target = $region13
  $region12: #{cnn3_forward.4} parent=0 // pred_region
    _
  $region13: #{cnn3_forward.4} parent=0 // pred_fallthru
    _
  %v15 = vld [vmem:[%s0] sm:$0xff]
  %v16 = vld [vmem:[%s0 + $0x8] sm:$0xff]
  %v17 = vld [vmem:[%s0 + $0x10] sm:$0xff]
  %v18 = vld [vmem:[%s0 + $0x18] sm:$0xff]
  %v19 = vld [vmem:[%s0 + $0x20] sm:$0xff]
  %v20 = vld [vmem:[%s0 + $0x28] sm:$0xff]
  %v21 = vld [vmem:[%s0 + $0x30] sm:$0xff]
  %v22 = vld [vmem:[%s0 + $0x38] sm:$0xff]
  %v23 = vld [vmem:[%s1] sm:$0xf]
  %v24 = vld [vmem:[%s1 + $0x4] sm:$0xf]
  %v25 = vld [vmem:[%s1 + $0x8] sm:$0xf]
  %v26 = vld [vmem:[%s1 + $0xc] sm:$0xf]
  %v27 = vld [vmem:[%s1 + $0x10] sm:$0xf]
  %v28 = vld [vmem:[%s1 + $0x14] sm:$0xf]
  %v29 = vld [vmem:[%s1 + $0x18] sm:$0xf]
  %v30 = vld [vmem:[%s1 + $0x1c] sm:$0xf]
  %v31 = vld [vmem:[%s1 + $0x20] sm:$0xf]
  %v32 = vld [vmem:[%s1 + $0x24] sm:$0xf]
  %v33 = vld [vmem:[%s1 + $0x28] sm:$0xf]
  %v34 = vld [vmem:[%s1 + $0x2c] sm:$0xf]
  %v35 = vld [vmem:[%s1 + $0x30] sm:$0xf]
  %v36 = vld [vmem:[%s1 + $0x34] sm:$0xf]
  %v37 = vld [vmem:[%s1 + $0x38] sm:$0xf]
  %v38 = vld [vmem:[%s1 + $0x3c] sm:$0xf]
  %v39 = vld [vmem:[%s1 + $0x40] sm:$0xf]
  %v40 = vld [vmem:[%s1 + $0x44] sm:$0xf]
  %v41 = vld [vmem:[%s1 + $0x48] sm:$0xf]
  %v42 = vld [vmem:[%s1 + $0x4c] sm:$0xf]
  %v43 = vld [vmem:[%s1 + $0x50] sm:$0xf]
  %v44 = vld [vmem:[%s1 + $0x54] sm:$0xf]
  %v45 = vld [vmem:[%s1 + $0x58] sm:$0xf]
  %v46 = vld [vmem:[%s1 + $0x5c] sm:$0xf]
  %v47 = vld [vmem:[%s1 + $0x60] sm:$0xf]
  %v48 = vld [vmem:[%s1 + $0x64] sm:$0xf]
  %v49 = vld [vmem:[%s1 + $0x68] sm:$0xf]
  %v50 = vld [vmem:[%s1 + $0x6c] sm:$0xf]
  %v51 = vld [vmem:[%s1 + $0x70] sm:$0xf]
  %v52 = vld [vmem:[%s1 + $0x74] sm:$0xf]
  %v53 = vld [vmem:[%s1 + $0x78] sm:$0xf]
  %v54 = vld [vmem:[%s1 + $0x7c] sm:$0xf]
  %v55 = vld [vmem:[%s1 + $0x80] sm:$0xf]
  %v56 = vld [vmem:[%s1 + $0x84] sm:$0xf]
  %v57 = vld [vmem:[%s1 + $0x88] sm:$0xf]
  %v58 = vld [vmem:[%s1 + $0x8c] sm:$0xf]
  %v59 = vld [vmem:[%s1 + $0x90] sm:$0xf]
  %v60 = vld [vmem:[%s1 + $0x94] sm:$0xf]
  %v61 = vld [vmem:[%s1 + $0x98] sm:$0xf]
  %v62 = vld [vmem:[%s1 + $0x9c] sm:$0xf]
  %v63 = vld [vmem:[%s1 + $0xa0] sm:$0xf]
  %v64 = vld [vmem:[%s1 + $0xa4] sm:$0xf]
  %v65 = vld [vmem:[%s1 + $0xa8] sm:$0xf]
  %v66 = vld [vmem:[%s1 + $0xac] sm:$0xf]
  %v67 = vld [vmem:[%s1 + $0xb0] sm:$0xf]
  %v68 = vld [vmem:[%s1 + $0xb4] sm:$0xf]
  %v69 = vld [vmem:[%s1 + $0xb8] sm:$0xf]
  %v70 = vld [vmem:[%s1 + $0xbc] sm:$0xf]
  %v71 = vld [vmem:[%s1 + $0xc0] sm:$0xf]
  %v72 = vld [vmem:[%s1 + $0xc4] sm:$0xf]
  %v73 = vld [vmem:[%s1 + $0xc8] sm:$0xf]
  %v74 = vld [vmem:[%s1 + $0xcc] sm:$0xf]
  %v75 = vld [vmem:[%s1 + $0xd0] sm:$0xf]
  %v76 = vld [vmem:[%s1 + $0xd4] sm:$0xf]
  %v77 = vld [vmem:[%s1 + $0xd8] sm:$0xf]
  %v78 = vld [vmem:[%s1 + $0xdc] sm:$0xf]
  %v79 = vld [vmem:[%s1 + $0xe0] sm:$0xf]
  %v80 = vld [vmem:[%s1 + $0xe4] sm:$0xf]
  %v81 = vld [vmem:[%s1 + $0xe8] sm:$0xf]
  %v82 = vld [vmem:[%s1 + $0xec] sm:$0xf]
  %v83 = vld [vmem:[%s1 + $0xf0] sm:$0xf]
  %v84 = vld [vmem:[%s1 + $0xf4] sm:$0xf]
  %v85 = vld [vmem:[%s1 + $0xf8] sm:$0xf]
  %v86 = vld [vmem:[%s1 + $0xfc] sm:$0xf]
  %v95 = vunpack.c.l.b16 %v15
  %v96 = vunpack.c.h.b16 %v15
  %v97 = vunpack.c.l.b16 %v16
  %v98 = vunpack.c.h.b16 %v16
  %v99 = vunpack.c.l.b16 %v17
  %v100 = vunpack.c.h.b16 %v17
  %v101 = vunpack.c.l.b16 %v18
  %v102 = vunpack.c.h.b16 %v18
  %v103 = vunpack.c.l.b16 %v19
  %v104 = vunpack.c.h.b16 %v19
  %v105 = vunpack.c.l.b16 %v20
  %v106 = vunpack.c.h.b16 %v20
  %v107 = vunpack.c.l.b16 %v21
  %v108 = vunpack.c.h.b16 %v21
  %v109 = vunpack.c.l.b16 %v22
  %v110 = vunpack.c.h.b16 %v22
  %v111 = vpack.c.b16 %v99, %v95
  %v112 = vpack.c.b16 %v100, %v96
  %v113 = vpack.c.b16 %v101, %v97
  %v114 = vpack.c.b16 %v102, %v98
  %v115 = vpack.c.b16 %v107, %v103
  %v116 = vpack.c.b16 %v108, %v104
  %v117 = vpack.c.b16 %v109, %v105
  %v118 = vpack.c.b16 %v110, %v106
  %v191 = vunpack.c.l.b16 %v23
  %v192 = vunpack.c.l.b16 %v24
  %v193 = vunpack.c.l.b16 %v25
  %v194 = vunpack.c.l.b16 %v26
  %v195 = vunpack.c.l.b16 %v27
  %v196 = vunpack.c.l.b16 %v28
  %v197 = vunpack.c.l.b16 %v29
  %v198 = vunpack.c.l.b16 %v30
  %v199 = vunpack.c.l.b16 %v31
  %v200 = vunpack.c.l.b16 %v32
  %v201 = vunpack.c.l.b16 %v33
  %v202 = vunpack.c.l.b16 %v34
  %v203 = vunpack.c.l.b16 %v35
  %v204 = vunpack.c.l.b16 %v36
  %v205 = vunpack.c.l.b16 %v37
  %v206 = vunpack.c.l.b16 %v38
  %v207 = vunpack.c.l.b16 %v39
  %v208 = vunpack.c.l.b16 %v40
  %v209 = vunpack.c.l.b16 %v41
  %v210 = vunpack.c.l.b16 %v42
  %v211 = vunpack.c.l.b16 %v43
  %v212 = vunpack.c.l.b16 %v44
  %v213 = vunpack.c.l.b16 %v45
  %v214 = vunpack.c.l.b16 %v46
  %v215 = vunpack.c.l.b16 %v47
  %v216 = vunpack.c.l.b16 %v48
  %v217 = vunpack.c.l.b16 %v49
  %v218 = vunpack.c.l.b16 %v50
  %v219 = vunpack.c.l.b16 %v51
  %v220 = vunpack.c.l.b16 %v52
  %v221 = vunpack.c.l.b16 %v53
  %v222 = vunpack.c.l.b16 %v54
  %v223 = vunpack.c.l.b16 %v55
  %v224 = vunpack.c.l.b16 %v56
  %v225 = vunpack.c.l.b16 %v57
  %v226 = vunpack.c.l.b16 %v58
  %v227 = vunpack.c.l.b16 %v59
  %v228 = vunpack.c.l.b16 %v60
  %v229 = vunpack.c.l.b16 %v61
  %v230 = vunpack.c.l.b16 %v62
  %v231 = vunpack.c.l.b16 %v63
  %v232 = vunpack.c.l.b16 %v64
  %v233 = vunpack.c.l.b16 %v65
  %v234 = vunpack.c.l.b16 %v66
  %v235 = vunpack.c.l.b16 %v67
  %v236 = vunpack.c.l.b16 %v68
  %v237 = vunpack.c.l.b16 %v69
  %v238 = vunpack.c.l.b16 %v70
  %v239 = vunpack.c.l.b16 %v71
  %v240 = vunpack.c.l.b16 %v72
  %v241 = vunpack.c.l.b16 %v73
  %v242 = vunpack.c.l.b16 %v74
  %v243 = vunpack.c.l.b16 %v75
  %v244 = vunpack.c.l.b16 %v76
  %v245 = vunpack.c.l.b16 %v77
  %v246 = vunpack.c.l.b16 %v78
  %v247 = vunpack.c.l.b16 %v79
  %v248 = vunpack.c.l.b16 %v80
  %v249 = vunpack.c.l.b16 %v81
  %v250 = vunpack.c.l.b16 %v82
  %v251 = vunpack.c.l.b16 %v83
  %v252 = vunpack.c.l.b16 %v84
  %v253 = vunpack.c.l.b16 %v85
  %v254 = vunpack.c.l.b16 %v86
  %v255 = vpack.c.b16 %v192, %v191
  %v256 = vpack.c.b16 %v194, %v193
  %v257 = vpack.c.b16 %v196, %v195
  %v258 = vpack.c.b16 %v198, %v197
  %v259 = vpack.c.b16 %v200, %v199
  %v260 = vpack.c.b16 %v202, %v201
  %v261 = vpack.c.b16 %v204, %v203
  %v262 = vpack.c.b16 %v206, %v205
  %v263 = vpack.c.b16 %v208, %v207
  %v264 = vpack.c.b16 %v210, %v209
  %v265 = vpack.c.b16 %v212, %v211
  %v266 = vpack.c.b16 %v214, %v213
  %v267 = vpack.c.b16 %v216, %v215
  %v268 = vpack.c.b16 %v218, %v217
  %v269 = vpack.c.b16 %v220, %v219
  %v270 = vpack.c.b16 %v222, %v221
  %v271 = vpack.c.b16 %v224, %v223
  %v272 = vpack.c.b16 %v226, %v225
  %v273 = vpack.c.b16 %v228, %v227
  %v274 = vpack.c.b16 %v230, %v229
  %v275 = vpack.c.b16 %v232, %v231
  %v276 = vpack.c.b16 %v234, %v233
  %v277 = vpack.c.b16 %v236, %v235
  %v278 = vpack.c.b16 %v238, %v237
  %v279 = vpack.c.b16 %v240, %v239
  %v280 = vpack.c.b16 %v242, %v241
  %v281 = vpack.c.b16 %v244, %v243
  %v282 = vpack.c.b16 %v246, %v245
  %v283 = vpack.c.b16 %v248, %v247
  %v284 = vpack.c.b16 %v250, %v249
  %v285 = vpack.c.b16 %v252, %v251
  %v286 = vpack.c.b16 %v254, %v253
  %319 = vmatprep.subr.bf16.mxu0 0
  %320 = vmatpush1.bf16.msra.mxu0 %v255
  %321 = vmatprep.subr.bf16.mxu0 0
  %322 = vmatpush1.bf16.msra.mxu0 %v256
  %323 = vmatprep.subr.bf16.mxu0 0
  %324 = vmatpush1.bf16.msra.mxu0 %v257
  %325 = vmatprep.subr.bf16.mxu0 0
  %326 = vmatpush1.bf16.msra.mxu0 %v258
  %327 = vmatprep.subr.bf16.mxu0 0
  %328 = vmatpush1.bf16.msra.mxu0 %v259
  %329 = vmatprep.subr.bf16.mxu0 0
  %330 = vmatpush1.bf16.msra.mxu0 %v260
  %331 = vmatprep.subr.bf16.mxu0 0
  %332 = vmatpush1.bf16.msra.mxu0 %v261
  %333 = vmatprep.subr.bf16.mxu0 0
  %334 = vmatpush1.bf16.msra.mxu0 %v262
  %335 = vmatprep.subr.bf16.mxu0 0
  %336 = vmatpush1.bf16.msra.mxu0 %v263
  %337 = vmatprep.subr.bf16.mxu0 0
  %338 = vmatpush1.bf16.msra.mxu0 %v264
  %339 = vmatprep.subr.bf16.mxu0 0
  %340 = vmatpush1.bf16.msra.mxu0 %v265
  %341 = vmatprep.subr.bf16.mxu0 0
  %342 = vmatpush1.bf16.msra.mxu0 %v266
  %343 = vmatprep.subr.bf16.mxu0 0
  %344 = vmatpush1.bf16.msra.mxu0 %v267
  %345 = vmatprep.subr.bf16.mxu0 0
  %346 = vmatpush1.bf16.msra.mxu0 %v268
  %347 = vmatprep.subr.bf16.mxu0 0
  %348 = vmatpush1.bf16.msra.mxu0 %v269
  %349 = vmatprep.subr.bf16.mxu0 0
  %350 = vmatpush1.bf16.msra.mxu0 %v270
  %351 = vmatprep.mubr.bf16.mxu0 %v112
  %352 = vmatmul.mubr.bf16.gmra.mrb[0].mxu0 %v111
  %v353 = vpop.f32.mrb[0].mxu0
  %v354 = vadd.f32 0.0, %v353
  %v355 = vpop.f32.mrb[0].mxu0
  %v356 = vpop.f32.mrb[0].mxu0
  %v357 = vadd.f32 0.0, %v356
  %v358 = vpop.f32.mrb[0].mxu0
  %359 = vmatprep.mubr.bf16.mxu0 %v116
  %360 = vmatmul.mubr.bf16.gmra.mrb[0].mxu0 %v115
  %v361 = vpop.f32.mrb[0].mxu0
  %v362 = vadd.f32 0.0, %v361
  %v363 = vpop.f32.mrb[0].mxu0
  %v364 = vpop.f32.mrb[0].mxu0
  %v365 = vadd.f32 0.0, %v364
  %v366 = vpop.f32.mrb[0].mxu0
  %367 = vdwg.mxu0
  %368 = vmatprep.subr.bf16.mxu0 0
  %369 = vmatpush1.bf16.msra.mxu0 %v271
  %370 = vmatprep.subr.bf16.mxu0 0
  %371 = vmatpush1.bf16.msra.mxu0 %v272
  %372 = vmatprep.subr.bf16.mxu0 0
  %373 = vmatpush1.bf16.msra.mxu0 %v273
  %374 = vmatprep.subr.bf16.mxu0 0
  %375 = vmatpush1.bf16.msra.mxu0 %v274
  %376 = vmatprep.subr.bf16.mxu0 0
  %377 = vmatpush1.bf16.msra.mxu0 %v275
  %378 = vmatprep.subr.bf16.mxu0 0
  %379 = vmatpush1.bf16.msra.mxu0 %v276
  %380 = vmatprep.subr.bf16.mxu0 0
  %381 = vmatpush1.bf16.msra.mxu0 %v277
  %382 = vmatprep.subr.bf16.mxu0 0
  %383 = vmatpush1.bf16.msra.mxu0 %v278
  %384 = vmatprep.subr.bf16.mxu0 0
  %385 = vmatpush1.bf16.msra.mxu0 %v279
  %386 = vmatprep.subr.bf16.mxu0 0
  %387 = vmatpush1.bf16.msra.mxu0 %v280
  %388 = vmatprep.subr.bf16.mxu0 0
  %389 = vmatpush1.bf16.msra.mxu0 %v281
  %390 = vmatprep.subr.bf16.mxu0 0
  %391 = vmatpush1.bf16.msra.mxu0 %v282
  %392 = vmatprep.subr.bf16.mxu0 0
  %393 = vmatpush1.bf16.msra.mxu0 %v283
  %394 = vmatprep.subr.bf16.mxu0 0
  %395 = vmatpush1.bf16.msra.mxu0 %v284
  %396 = vmatprep.subr.bf16.mxu0 0
  %397 = vmatpush1.bf16.msra.mxu0 %v285
  %398 = vmatprep.subr.bf16.mxu0 0
  %399 = vmatpush1.bf16.msra.mxu0 %v286
  %400 = vmatprep.mubr.bf16.mxu0 %v114
  %401 = vmatmul.mubr.bf16.gmra.mrb[0].mxu0 %v113
  %v402 = vpop.f32.mrb[0].mxu0
  %v403 = vadd.f32 %v354, %v402
  %v404 = vpop.f32.mrb[0].mxu0
  %v405 = vpop.f32.mrb[0].mxu0
  %v406 = vadd.f32 %v357, %v405
  %v407 = vpop.f32.mrb[0].mxu0
  %408 = vmatprep.mubr.bf16.mxu0 %v118
  %409 = vmatmul.mubr.bf16.gmra.mrb[0].mxu0 %v117
  %v410 = vpop.f32.mrb[0].mxu0
  %v411 = vadd.f32 %v362, %v410
  %v412 = vpop.f32.mrb[0].mxu0
  %v413 = vpop.f32.mrb[0].mxu0
  %v414 = vadd.f32 %v365, %v413
  %v415 = vpop.f32.mrb[0].mxu0
  %416 = vdwg.mxu0
  %v417 = vadd.f32 %v403, %v406
  %v418 = vadd.f32 %v417, %v411
  %v419 = vadd.f32 %v418, %v414
  %v420 = vrot.slane %v419, 4
  %v421 = vadd.f32 %v419, %v420
  %v422 = vrot.slane %v421, 2
  %v423 = vadd.f32 %v421, %v422
  %v424 = vrot.slane %v423, 1
  %v425 = vadd.f32 %v423, %v424
  %v426 = vmul.f32 %v403, %v403
  %v427 = vmul.f32 %v406, %v406
  %v428 = vmul.f32 %v411, %v411
  %v429 = vmul.f32 %v414, %v414
  %v430 = vadd.f32 %v426, %v427
  %v431 = vadd.f32 %v430, %v428
  %v432 = vadd.f32 %v431, %v429
  %v433 = vrot.slane %v432, 4
  %v434 = vadd.f32 %v432, %v433
  %v435 = vrot.slane %v434, 2
  %v436 = vadd.f32 %v434, %v435
  %v437 = vrot.slane %v436, 1
  %v438 = vadd.f32 %v436, %v437
  %v439 = vmul.f32 %v425, 0.03125
  %v440 = vmul.f32 %v438, 0.03125
  %v441 = vmul.f32 %v439, %v439
  %v442 = vsub.f32 %v440, %v441
  %v443 = vmax.f32 %v442, 0.0
  %v444 = vld [vmem:[%s2] sm:$0x1]
  %v445 = vld [vmem:[%s2 + $0x1] sm:$0x1]
  %v446 = vadd.f32 %v443, 1e-05
  %v447 = vrsqrt.pop %v446
  %v448 = vmul.f32 %v444, %v447
  %v449 = vmul.f32 %v439, %v448
  %v450 = vsub.f32 %v445, %v449
  %v451 = vlaneseq
  %v452 = vshrl.u32 %v451, 7
  %v453 = vsub.s32 0, %v452
  %v454 = vrot.slane %v448, %v453
  %v455 = vmul.f32 %v403, %v454
  %v456 = vmul.f32 %v406, %v454
  %v457 = vmul.f32 %v411, %v454
  %v458 = vmul.f32 %v414, %v454
  %v459 = vlaneseq
  %v460 = vshrl.u32 %v459, 7
  %v461 = vsub.s32 0, %v460
  %v462 = vrot.slane %v450, %v461
  %v463 = vadd.f32 %v455, %v462
  %v464 = vadd.f32 %v456, %v462
  %v465 = vadd.f32 %v457, %v462
  %v466 = vadd.f32 %v458, %v462
  %v467 = vmax.f32 %v463, 0.0
  %v468 = vmax.f32 %v464, 0.0
  %v469 = vmax.f32 %v465, 0.0
  %v470 = vmax.f32 %v466, 0.0
  %471 = vst [vmem:[%s3] sm:$0xff] %v467
  %472 = vst [vmem:[%s3 + $0x8] sm:$0xff] %v468
  %473 = vst [vmem:[%s3 + $0x10] sm:$0xff] %v469
  %474 = vst [vmem:[%s3 + $0x18] sm:$0xff] %v470
  // Predicated region
  $region14: #{cnn3_forward.4} parent=0 // pred_check
    _
  $region15: #{cnn3_forward.4} parent=0 // pred_check_branch
    %476 = sbr.rel (0) target = $region17
  $region16: #{cnn3_forward.4} parent=0 // pred_region
    _
  $region17: #{cnn3_forward.4} parent=0 // pred_fallthru
    _
  // Predicated region
  $region18: #{cnn3_forward.4} parent=0 // pred_check
    _
  $region19: #{cnn3_forward.4} parent=0 // pred_check_branch
    %478 = sbr.rel (0) target = $region21
  $region20: #{cnn3_forward.4} parent=0 // pred_region
    _
  $region21: #{cnn3_forward.4} parent=0 // pred_fallthru
    _

// kernel: cnn3_forward.5
$region0: #{cnn3_forward.5}
  #allocation0 [shape = 'u32[]', space=smem, size = 0x4, offset = 0x4, fixed_abs, tag = 'smem constant byte address 0x4 - core index']
  #allocation1 [shape = 'u32[144,128]{1,0:T(1,128)}', space=vmem, size = 0x12000, scoped, tag = 'internal scratch']
  %s0 = inlined_call_operand.vmem [shape: bf16[8,1024], index: 0, kind: input, shape index: {}]
  %s1 = inlined_call_operand.vmem [shape: bf16[1024,128], index: 1, kind: input, shape index: {}]
  %s2 = inlined_call_operand.vmem [shape: f32[8,128], index: 2, kind: input, shape index: {}]
  %s3 = inlined_call_operand.hbm [shape: f32[8,128], index: 3, kind: output, shape index: {}]
  %s4 = sld [smem:[#allocation0]]
  $region22: #{cnn3_forward.5} parent=0
    _
  %s6 = ssub.s32 1, %s4
  %s7 = scalar_select 0, %s6, %s4
  $region1: #{cnn3_forward.5} parent=0
    #allocation2 [shape = 'u8[4096]{0}', space=vmem, size = 0x1000, scoped, tag = 'output window, operand 0, single buffered']
    #allocation3 [shape = 's32[1]{0}', space=sflag, size = 0x4, scoped, tag = 'scoped memory for cnn3_forward.5']
    %8 = vsyncpa [#allocation3], 0
    // Predicated region
    $region2: #{cnn3_forward.5} parent=1 // pred_check
      _
    $region3: #{cnn3_forward.5} parent=1 // pred_check_branch
      %10 = sbr.rel (0) target = $region5
    $region4: #{cnn3_forward.5} parent=1 // pred_region
      _
    $region5: #{cnn3_forward.5} parent=1 // pred_fallthru
      _
    // Predicated region
    $region6: #{cnn3_forward.5} parent=1 // pred_check
      _
    $region7: #{cnn3_forward.5} parent=1 // pred_check_branch
      %12 = sbr.rel (0) target = $region9
    $region8: #{cnn3_forward.5} parent=1 // pred_region
      _
    $region9: #{cnn3_forward.5} parent=1 // pred_fallthru
      _
    // Predicated region
    $region10: #{cnn3_forward.5} parent=1 // pred_check
      _
    $region11: #{cnn3_forward.5} parent=1 // pred_check_branch
      %14 = sbr.rel (0) target = $region13
    $region12: #{cnn3_forward.5} parent=1 // pred_region
      _
    $region13: #{cnn3_forward.5} parent=1 // pred_fallthru
      _
    %v16 = vld [vmem:[%s0] sm:$0xff]
    %v17 = vld [vmem:[%s0 + $0x8] sm:$0xff]
    %v18 = vld [vmem:[%s0 + $0x10] sm:$0xff]
    %v19 = vld [vmem:[%s0 + $0x18] sm:$0xff]
    %v20 = vld [vmem:[%s1] sm:$0xf]
    %v21 = vld [vmem:[%s1 + $0x4] sm:$0xf]
    %v22 = vld [vmem:[%s1 + $0x8] sm:$0xf]
    %v23 = vld [vmem:[%s1 + $0xc] sm:$0xf]
    %v24 = vld [vmem:[%s1 + $0x10] sm:$0xf]
    %v25 = vld [vmem:[%s1 + $0x14] sm:$0xf]
    %v26 = vld [vmem:[%s1 + $0x18] sm:$0xf]
    %v27 = vld [vmem:[%s1 + $0x1c] sm:$0xf]
    %v28 = vld [vmem:[%s1 + $0x20] sm:$0xf]
    %v29 = vld [vmem:[%s1 + $0x24] sm:$0xf]
    %v30 = vld [vmem:[%s1 + $0x28] sm:$0xf]
    %v31 = vld [vmem:[%s1 + $0x2c] sm:$0xf]
    %v32 = vld [vmem:[%s1 + $0x30] sm:$0xf]
    %v33 = vld [vmem:[%s1 + $0x34] sm:$0xf]
    %v34 = vld [vmem:[%s1 + $0x38] sm:$0xf]
    %v35 = vld [vmem:[%s1 + $0x3c] sm:$0xf]
    %v36 = vld [vmem:[%s1 + $0x40] sm:$0xf]
    %v37 = vld [vmem:[%s1 + $0x44] sm:$0xf]
    %v38 = vld [vmem:[%s1 + $0x48] sm:$0xf]
    %v39 = vld [vmem:[%s1 + $0x4c] sm:$0xf]
    %v40 = vld [vmem:[%s1 + $0x50] sm:$0xf]
    %v41 = vld [vmem:[%s1 + $0x54] sm:$0xf]
    %v42 = vld [vmem:[%s1 + $0x58] sm:$0xf]
    %v43 = vld [vmem:[%s1 + $0x5c] sm:$0xf]
    %v44 = vld [vmem:[%s1 + $0x60] sm:$0xf]
    %v45 = vld [vmem:[%s1 + $0x64] sm:$0xf]
    %v46 = vld [vmem:[%s1 + $0x68] sm:$0xf]
    %v47 = vld [vmem:[%s1 + $0x6c] sm:$0xf]
    %v48 = vld [vmem:[%s1 + $0x70] sm:$0xf]
    %v49 = vld [vmem:[%s1 + $0x74] sm:$0xf]
    %v50 = vld [vmem:[%s1 + $0x78] sm:$0xf]
    %v51 = vld [vmem:[%s1 + $0x7c] sm:$0xf]
    %v52 = vld [vmem:[%s1 + $0x80] sm:$0xf]
    %v53 = vld [vmem:[%s1 + $0x84] sm:$0xf]
    %v54 = vld [vmem:[%s1 + $0x88] sm:$0xf]
    %v55 = vld [vmem:[%s1 + $0x8c] sm:$0xf]
    %v56 = vld [vmem:[%s1 + $0x90] sm:$0xf]
    %v57 = vld [vmem:[%s1 + $0x94] sm:$0xf]
    %v58 = vld [vmem:[%s1 + $0x98] sm:$0xf]
    %v59 = vld [vmem:[%s1 + $0x9c] sm:$0xf]
    %v60 = vld [vmem:[%s1 + $0xa0] sm:$0xf]
    %v61 = vld [vmem:[%s1 + $0xa4] sm:$0xf]
    %v62 = vld [vmem:[%s1 + $0xa8] sm:$0xf]
    %v63 = vld [vmem:[%s1 + $0xac] sm:$0xf]
    %v64 = vld [vmem:[%s1 + $0xb0] sm:$0xf]
    %v65 = vld [vmem:[%s1 + $0xb4] sm:$0xf]
    %v66 = vld [vmem:[%s1 + $0xb8] sm:$0xf]
    %v67 = vld [vmem:[%s1 + $0xbc] sm:$0xf]
    %v68 = vld [vmem:[%s1 + $0xc0] sm:$0xf]
    %v69 = vld [vmem:[%s1 + $0xc4] sm:$0xf]
    %v70 = vld [vmem:[%s1 + $0xc8] sm:$0xf]
    %v71 = vld [vmem:[%s1 + $0xcc] sm:$0xf]
    %v72 = vld [vmem:[%s1 + $0xd0] sm:$0xf]
    %v73 = vld [vmem:[%s1 + $0xd4] sm:$0xf]
    %v74 = vld [vmem:[%s1 + $0xd8] sm:$0xf]
    %v75 = vld [vmem:[%s1 + $0xdc] sm:$0xf]
    %v76 = vld [vmem:[%s1 + $0xe0] sm:$0xf]
    %v77 = vld [vmem:[%s1 + $0xe4] sm:$0xf]
    %v78 = vld [vmem:[%s1 + $0xe8] sm:$0xf]
    %v79 = vld [vmem:[%s1 + $0xec] sm:$0xf]
    %v80 = vld [vmem:[%s1 + $0xf0] sm:$0xf]
    %v81 = vld [vmem:[%s1 + $0xf4] sm:$0xf]
    %v82 = vld [vmem:[%s1 + $0xf8] sm:$0xf]
    %v83 = vld [vmem:[%s1 + $0xfc] sm:$0xf]
    %v84 = vld [vmem:[%s1 + $0x100] sm:$0xf]
    %v85 = vld [vmem:[%s1 + $0x104] sm:$0xf]
    %v86 = vld [vmem:[%s1 + $0x108] sm:$0xf]
    %v87 = vld [vmem:[%s1 + $0x10c] sm:$0xf]
    %v88 = vld [vmem:[%s1 + $0x110] sm:$0xf]
    %v89 = vld [vmem:[%s1 + $0x114] sm:$0xf]
    %v90 = vld [vmem:[%s1 + $0x118] sm:$0xf]
    %v91 = vld [vmem:[%s1 + $0x11c] sm:$0xf]
    %v92 = vld [vmem:[%s1 + $0x120] sm:$0xf]
    %v93 = vld [vmem:[%s1 + $0x124] sm:$0xf]
    %v94 = vld [vmem:[%s1 + $0x128] sm:$0xf]
    %v95 = vld [vmem:[%s1 + $0x12c] sm:$0xf]
    %v96 = vld [vmem:[%s1 + $0x130] sm:$0xf]
    %v97 = vld [vmem:[%s1 + $0x134] sm:$0xf]
    %v98 = vld [vmem:[%s1 + $0x138] sm:$0xf]
    %v99 = vld [vmem:[%s1 + $0x13c] sm:$0xf]
    %v100 = vld [vmem:[%s1 + $0x140] sm:$0xf]
    %v101 = vld [vmem:[%s1 + $0x144] sm:$0xf]
    %v102 = vld [vmem:[%s1 + $0x148] sm:$0xf]
    %v103 = vld [vmem:[%s1 + $0x14c] sm:$0xf]
    %v104 = vld [vmem:[%s1 + $0x150] sm:$0xf]
    %v105 = vld [vmem:[%s1 + $0x154] sm:$0xf]
    %v106 = vld [vmem:[%s1 + $0x158] sm:$0xf]
    %v107 = vld [vmem:[%s1 + $0x15c] sm:$0xf]
    %v108 = vld [vmem:[%s1 + $0x160] sm:$0xf]
    %v109 = vld [vmem:[%s1 + $0x164] sm:$0xf]
    %v110 = vld [vmem:[%s1 + $0x168] sm:$0xf]
    %v111 = vld [vmem:[%s1 + $0x16c] sm:$0xf]
    %v112 = vld [vmem:[%s1 + $0x170] sm:$0xf]
    %v113 = vld [vmem:[%s1 + $0x174] sm:$0xf]
    %v114 = vld [vmem:[%s1 + $0x178] sm:$0xf]
    %v115 = vld [vmem:[%s1 + $0x17c] sm:$0xf]
    %v116 = vld [vmem:[%s1 + $0x180] sm:$0xf]
    %v117 = vld [vmem:[%s1 + $0x184] sm:$0xf]
    %v118 = vld [vmem:[%s1 + $0x188] sm:$0xf]
    %v119 = vld [vmem:[%s1 + $0x18c] sm:$0xf]
    %v120 = vld [vmem:[%s1 + $0x190] sm:$0xf]
    %v121 = vld [vmem:[%s1 + $0x194] sm:$0xf]
    %v122 = vld [vmem:[%s1 + $0x198] sm:$0xf]
    %v123 = vld [vmem:[%s1 + $0x19c] sm:$0xf]
    %v124 = vld [vmem:[%s1 + $0x1a0] sm:$0xf]
    %v125 = vld [vmem:[%s1 + $0x1a4] sm:$0xf]
    %v126 = vld [vmem:[%s1 + $0x1a8] sm:$0xf]
    %v127 = vld [vmem:[%s1 + $0x1ac] sm:$0xf]
    %v128 = vld [vmem:[%s1 + $0x1b0] sm:$0xf]
    %v129 = vld [vmem:[%s1 + $0x1b4] sm:$0xf]
    %v130 = vld [vmem:[%s1 + $0x1b8] sm:$0xf]
    %v131 = vld [vmem:[%s1 + $0x1bc] sm:$0xf]
    %v132 = vld [vmem:[%s1 + $0x1c0] sm:$0xf]
    %v133 = vld [vmem:[%s1 + $0x1c4] sm:$0xf]
    %v134 = vld [vmem:[%s1 + $0x1c8] sm:$0xf]
    %v135 = vld [vmem:[%s1 + $0x1cc] sm:$0xf]
    %v136 = vld [vmem:[%s1 + $0x1d0] sm:$0xf]
    %v137 = vld [vmem:[%s1 + $0x1d4] sm:$0xf]
    %v138 = vld [vmem:[%s1 + $0x1d8] sm:$0xf]
    %v139 = vld [vmem:[%s1 + $0x1dc] sm:$0xf]
    %v140 = vld [vmem:[%s1 + $0x1e0] sm:$0xf]
    %v141 = vld [vmem:[%s1 + $0x1e4] sm:$0xf]
    %v142 = vld [vmem:[%s1 + $0x1e8] sm:$0xf]
    %v143 = vld [vmem:[%s1 + $0x1ec] sm:$0xf]
    %v144 = vld [vmem:[%s1 + $0x1f0] sm:$0xf]
    %v145 = vld [vmem:[%s1 + $0x1f4] sm:$0xf]
    %v146 = vld [vmem:[%s1 + $0x1f8] sm:$0xf]
    %v147 = vld [vmem:[%s1 + $0x1fc] sm:$0xf]
    %v152 = vunpack.c.l.b16 %v16
    %v153 = vunpack.c.h.b16 %v16
    %v154 = vunpack.c.l.b16 %v17
    %v155 = vunpack.c.h.b16 %v17
    %v156 = vunpack.c.l.b16 %v18
    %v157 = vunpack.c.h.b16 %v18
    %v158 = vunpack.c.l.b16 %v19
    %v159 = vunpack.c.h.b16 %v19
    %v160 = vpack.c.b16 %v152, %v152
    %v161 = vpack.c.b16 %v153, %v153
    %v162 = vpack.c.b16 %v154, %v154
    %v163 = vpack.c.b16 %v155, %v155
    %v164 = vpack.c.b16 %v156, %v156
    %v165 = vpack.c.b16 %v157, %v157
    %v166 = vpack.c.b16 %v158, %v158
    %v167 = vpack.c.b16 %v159, %v159
    %v304 = vunpack.c.l.b16 %v20
    %v305 = vunpack.c.l.b16 %v21
    %v306 = vunpack.c.l.b16 %v22
    %v307 = vunpack.c.l.b16 %v23
    %v308 = vunpack.c.l.b16 %v24
    %v309 = vunpack.c.l.b16 %v25
    %v310 = vunpack.c.l.b16 %v26
    %v311 = vunpack.c.l.b16 %v27
    %v312 = vunpack.c.l.b16 %v28
    %v313 = vunpack.c.l.b16 %v29
    %v314 = vunpack.c.l.b16 %v30
    %v315 = vunpack.c.l.b16 %v31
    %v316 = vunpack.c.l.b16 %v32
    %v317 = vunpack.c.l.b16 %v33
    %v318 = vunpack.c.l.b16 %v34
    %v319 = vunpack.c.l.b16 %v35
    %v320 = vunpack.c.l.b16 %v36
    %v321 = vunpack.c.l.b16 %v37
    %v322 = vunpack.c.l.b16 %v38
    %v323 = vunpack.c.l.b16 %v39
    %v324 = vunpack.c.l.b16 %v40
    %v325 = vunpack.c.l.b16 %v41
    %v326 = vunpack.c.l.b16 %v42
    %v327 = vunpack.c.l.b16 %v43
    %v328 = vunpack.c.l.b16 %v44
    %v329 = vunpack.c.l.b16 %v45
    %v330 = vunpack.c.l.b16 %v46
    %v331 = vunpack.c.l.b16 %v47
    %v332 = vunpack.c.l.b16 %v48
    %v333 = vunpack.c.l.b16 %v49
    %v334 = vunpack.c.l.b16 %v50
    %v335 = vunpack.c.l.b16 %v51
    %v336 = vunpack.c.l.b16 %v52
    %v337 = vunpack.c.l.b16 %v53
    %v338 = vunpack.c.l.b16 %v54
    %v339 = vunpack.c.l.b16 %v55
    %v340 = vunpack.c.l.b16 %v56
    %v341 = vunpack.c.l.b16 %v57
    %v342 = vunpack.c.l.b16 %v58
    %v343 = vunpack.c.l.b16 %v59
    %v344 = vunpack.c.l.b16 %v60
    %v345 = vunpack.c.l.b16 %v61
    %v346 = vunpack.c.l.b16 %v62
    %v347 = vunpack.c.l.b16 %v63
    %v348 = vunpack.c.l.b16 %v64
    %v349 = vunpack.c.l.b16 %v65
    %v350 = vunpack.c.l.b16 %v66
    %v351 = vunpack.c.l.b16 %v67
    %v352 = vunpack.c.l.b16 %v68
    %v353 = vunpack.c.l.b16 %v69
    %v354 = vunpack.c.l.b16 %v70
    %v355 = vunpack.c.l.b16 %v71
    %v356 = vunpack.c.l.b16 %v72
    %v357 = vunpack.c.l.b16 %v73
    %v358 = vunpack.c.l.b16 %v74
    %v359 = vunpack.c.l.b16 %v75
    %v360 = vunpack.c.l.b16 %v76
    %v361 = vunpack.c.l.b16 %v77
    %v362 = vunpack.c.l.b16 %v78
    %v363 = vunpack.c.l.b16 %v79
    %v364 = vunpack.c.l.b16 %v80
    %v365 = vunpack.c.l.b16 %v81
    %v366 = vunpack.c.l.b16 %v82
    %v367 = vunpack.c.l.b16 %v83
    %v368 = vunpack.c.l.b16 %v84
    %v369 = vunpack.c.l.b16 %v85
    %v370 = vunpack.c.l.b16 %v86
    %v371 = vunpack.c.l.b16 %v87
    %v372 = vunpack.c.l.b16 %v88
    %v373 = vunpack.c.l.b16 %v89
    %v374 = vunpack.c.l.b16 %v90
    %v375 = vunpack.c.l.b16 %v91
    %v376 = vunpack.c.l.b16 %v92
    %v377 = vunpack.c.l.b16 %v93
    %v378 = vunpack.c.l.b16 %v94
    %v379 = vunpack.c.l.b16 %v95
    %v380 = vunpack.c.l.b16 %v96
    %v381 = vunpack.c.l.b16 %v97
    %v382 = vunpack.c.l.b16 %v98
    %v383 = vunpack.c.l.b16 %v99
    %v384 = vunpack.c.l.b16 %v100
    %v385 = vunpack.c.l.b16 %v101
    %v386 = vunpack.c.l.b16 %v102
    %v387 = vunpack.c.l.b16 %v103
    %v388 = vunpack.c.l.b16 %v104
    %v389 = vunpack.c.l.b16 %v105
    %v390 = vunpack.c.l.b16 %v106
    %v391 = vunpack.c.l.b16 %v107
    %v392 = vunpack.c.l.b16 %v108
    %v393 = vunpack.c.l.b16 %v109
    %v394 = vunpack.c.l.b16 %v110
    %v395 = vunpack.c.l.b16 %v111
    %v396 = vunpack.c.l.b16 %v112
    %v397 = vunpack.c.l.b16 %v113
    %v398 = vunpack.c.l.b16 %v114
    %v399 = vunpack.c.l.b16 %v115
    %v400 = vunpack.c.l.b16 %v116
    %v401 = vunpack.c.l.b16 %v117
    %v402 = vunpack.c.l.b16 %v118
    %v403 = vunpack.c.l.b16 %v119
    %v404 = vunpack.c.l.b16 %v120
    %v405 = vunpack.c.l.b16 %v121
    %v406 = vunpack.c.l.b16 %v122
    %v407 = vunpack.c.l.b16 %v123
    %v408 = vunpack.c.l.b16 %v124
    %v409 = vunpack.c.l.b16 %v125
    %v410 = vunpack.c.l.b16 %v126
    %v411 = vunpack.c.l.b16 %v127
    %v412 = vunpack.c.l.b16 %v128
    %v413 = vunpack.c.l.b16 %v129
    %v414 = vunpack.c.l.b16 %v130
    %v415 = vunpack.c.l.b16 %v131
    %v416 = vunpack.c.l.b16 %v132
    %v417 = vunpack.c.l.b16 %v133
    %v418 = vunpack.c.l.b16 %v134
    %v419 = vunpack.c.l.b16 %v135
    %v420 = vunpack.c.l.b16 %v136
    %v421 = vunpack.c.l.b16 %v137
    %v422 = vunpack.c.l.b16 %v138
    %v423 = vunpack.c.l.b16 %v139
    %v424 = vunpack.c.l.b16 %v140
    %v425 = vunpack.c.l.b16 %v141
    %v426 = vunpack.c.l.b16 %v142
    %v427 = vunpack.c.l.b16 %v143
    %v428 = vunpack.c.l.b16 %v144
    %v429 = vunpack.c.l.b16 %v145
    %v430 = vunpack.c.l.b16 %v146
    %v431 = vunpack.c.l.b16 %v147
    %v432 = vpack.c.b16 %v305, %v304
    %v433 = vpack.c.b16 %v307, %v306
    %v434 = vpack.c.b16 %v309, %v308
    %v435 = vpack.c.b16 %v311, %v310
    %v436 = vpack.c.b16 %v313, %v312
    %v437 = vpack.c.b16 %v315, %v314
    %v438 = vpack.c.b16 %v317, %v316
    %v439 = vpack.c.b16 %v319, %v318
    %v440 = vpack.c.b16 %v321, %v320
    %v441 = vpack.c.b16 %v323, %v322
    %v442 = vpack.c.b16 %v325, %v324
    %v443 = vpack.c.b16 %v327, %v326
    %v444 = vpack.c.b16 %v329, %v328
    %v445 = vpack.c.b16 %v331, %v330
    %v446 = vpack.c.b16 %v333, %v332
    %v447 = vpack.c.b16 %v335, %v334
    %v448 = vpack.c.b16 %v337, %v336
    %v449 = vpack.c.b16 %v339, %v338
    %v450 = vpack.c.b16 %v341, %v340
    %v451 = vpack.c.b16 %v343, %v342
    %v452 = vpack.c.b16 %v345, %v344
    %v453 = vpack.c.b16 %v347, %v346
    %v454 = vpack.c.b16 %v349, %v348
    %v455 = vpack.c.b16 %v351, %v350
    %v456 = vpack.c.b16 %v353, %v352
    %v457 = vpack.c.b16 %v355, %v354
    %v458 = vpack.c.b16 %v357, %v356
    %v459 = vpack.c.b16 %v359, %v358
    %v460 = vpack.c.b16 %v361, %v360
    %v461 = vpack.c.b16 %v363, %v362
    %v462 = vpack.c.b16 %v365, %v364
    %v463 = vpack.c.b16 %v367, %v366
    %v464 = vpack.c.b16 %v369, %v368
    %v465 = vpack.c.b16 %v371, %v370
    %v466 = vpack.c.b16 %v373, %v372
    %v467 = vpack.c.b16 %v375, %v374
    %v468 = vpack.c.b16 %v377, %v376
    %v469 = vpack.c.b16 %v379, %v378
    %v470 = vpack.c.b16 %v381, %v380
    %v471 = vpack.c.b16 %v383, %v382
    %v472 = vpack.c.b16 %v385, %v384
    %v473 = vpack.c.b16 %v387, %v386
    %v474 = vpack.c.b16 %v389, %v388
    %v475 = vpack.c.b16 %v391, %v390
    %v476 = vpack.c.b16 %v393, %v392
    %v477 = vpack.c.b16 %v395, %v394
    %v478 = vpack.c.b16 %v397, %v396
    %v479 = vpack.c.b16 %v399, %v398
    %v480 = vpack.c.b16 %v401, %v400
    %v481 = vpack.c.b16 %v403, %v402
    %v482 = vpack.c.b16 %v405, %v404
    %v483 = vpack.c.b16 %v407, %v406
    %v484 = vpack.c.b16 %v409, %v408
    %v485 = vpack.c.b16 %v411, %v410
    %v486 = vpack.c.b16 %v413, %v412
    %v487 = vpack.c.b16 %v415, %v414
    %v488 = vpack.c.b16 %v417, %v416
    %v489 = vpack.c.b16 %v419, %v418
    %v490 = vpack.c.b16 %v421, %v420
    %v491 = vpack.c.b16 %v423, %v422
    %v492 = vpack.c.b16 %v425, %v424
    %v493 = vpack.c.b16 %v427, %v426
    %v494 = vpack.c.b16 %v429, %v428
    %v495 = vpack.c.b16 %v431, %v430
    %560 = vmatprep.subr.bf16.mxu0 0
    %561 = vmatpush1.bf16.msra.mxu0 %v432
    %562 = vmatprep.subr.bf16.mxu0 0
    %563 = vmatpush1.bf16.msra.mxu0 %v433
    %564 = vmatprep.subr.bf16.mxu0 0
    %565 = vmatpush1.bf16.msra.mxu0 %v434
    %566 = vmatprep.subr.bf16.mxu0 0
    %567 = vmatpush1.bf16.msra.mxu0 %v435
    %568 = vmatprep.subr.bf16.mxu0 0
    %569 = vmatpush1.bf16.msra.mxu0 %v436
    %570 = vmatprep.subr.bf16.mxu0 0
    %571 = vmatpush1.bf16.msra.mxu0 %v437
    %572 = vmatprep.subr.bf16.mxu0 0
    %573 = vmatpush1.bf16.msra.mxu0 %v438
    %574 = vmatprep.subr.bf16.mxu0 0
    %575 = vmatpush1.bf16.msra.mxu0 %v439
    %576 = vmatprep.subr.bf16.mxu0 0
    %577 = vmatpush1.bf16.msra.mxu0 %v440
    %578 = vmatprep.subr.bf16.mxu0 0
    %579 = vmatpush1.bf16.msra.mxu0 %v441
    %580 = vmatprep.subr.bf16.mxu0 0
    %581 = vmatpush1.bf16.msra.mxu0 %v442
    %582 = vmatprep.subr.bf16.mxu0 0
    %583 = vmatpush1.bf16.msra.mxu0 %v443
    %584 = vmatprep.subr.bf16.mxu0 0
    %585 = vmatpush1.bf16.msra.mxu0 %v444
    %586 = vmatprep.subr.bf16.mxu0 0
    %587 = vmatpush1.bf16.msra.mxu0 %v445
    %588 = vmatprep.subr.bf16.mxu0 0
    %589 = vmatpush1.bf16.msra.mxu0 %v446
    %590 = vmatprep.subr.bf16.mxu0 0
    %591 = vmatpush1.bf16.msra.mxu0 %v447
    %592 = vmatprep.mubr.bf16.mxu0 %v161
    %593 = vmatmul.mubr.bf16.gmra.mrb[0].mxu0 %v160
    %v594 = vpop.f32.mrb[0].mxu0
    %v595 = vadd.f32 0.0, %v594
    %v596 = vpop.f32.mrb[0].mxu0
    %v597 = vpop.f32.mrb[0].mxu0
    %v598 = vpop.f32.mrb[0].mxu0
    %599 = vdwg.mxu0
    %600 = vmatprep.subr.bf16.mxu0 0
    %601 = vmatpush1.bf16.msra.mxu0 %v448
    %602 = vmatprep.subr.bf16.mxu0 0
    %603 = vmatpush1.bf16.msra.mxu0 %v449
    %604 = vmatprep.subr.bf16.mxu0 0
    %605 = vmatpush1.bf16.msra.mxu0 %v450
    %606 = vmatprep.subr.bf16.mxu0 0
    %607 = vmatpush1.bf16.msra.mxu0 %v451
    %608 = vmatprep.subr.bf16.mxu0 0
    %609 = vmatpush1.bf16.msra.mxu0 %v452
    %610 = vmatprep.subr.bf16.mxu0 0
    %611 = vmatpush1.bf16.msra.mxu0 %v453
    %612 = vmatprep.subr.bf16.mxu0 0
    %613 = vmatpush1.bf16.msra.mxu0 %v454
    %614 = vmatprep.subr.bf16.mxu0 0
    %615 = vmatpush1.bf16.msra.mxu0 %v455
    %616 = vmatprep.subr.bf16.mxu0 0
    %617 = vmatpush1.bf16.msra.mxu0 %v456
    %618 = vmatprep.subr.bf16.mxu0 0
    %619 = vmatpush1.bf16.msra.mxu0 %v457
    %620 = vmatprep.subr.bf16.mxu0 0
    %621 = vmatpush1.bf16.msra.mxu0 %v458
    %622 = vmatprep.subr.bf16.mxu0 0
    %623 = vmatpush1.bf16.msra.mxu0 %v459
    %624 = vmatprep.subr.bf16.mxu0 0
    %625 = vmatpush1.bf16.msra.mxu0 %v460
    %626 = vmatprep.subr.bf16.mxu0 0
    %627 = vmatpush1.bf16.msra.mxu0 %v461
    %628 = vmatprep.subr.bf16.mxu0 0
    %629 = vmatpush1.bf16.msra.mxu0 %v462
    %630 = vmatprep.subr.bf16.mxu0 0
    %631 = vmatpush1.bf16.msra.mxu0 %v463
    %632 = vmatprep.mubr.bf16.mxu0 %v163
    %633 = vmatmul.mubr.bf16.gmra.mrb[0].mxu0 %v162
    %v634 = vpop.f32.mrb[0].mxu0
    %v635 = vadd.f32 %v595, %v634
    %v636 = vpop.f32.mrb[0].mxu0
    %v637 = vpop.f32.mrb[0].mxu0
    %v638 = vpop.f32.mrb[0].mxu0
    %639 = vdwg.mxu0
    %640 = vmatprep.subr.bf16.mxu0 0
    %641 = vmatpush1.bf16.msra.mxu0 %v464
    %642 = vmatprep.subr.bf16.mxu0 0
    %643 = vmatpush1.bf16.msra.mxu0 %v465
    %644 = vmatprep.subr.bf16.mxu0 0
    %645 = vmatpush1.bf16.msra.mxu0 %v466
    %646 = vmatprep.subr.bf16.mxu0 0
    %647 = vmatpush1.bf16.msra.mxu0 %v467
    %648 = vmatprep.subr.bf16.mxu0 0
    %649 = vmatpush1.bf16.msra.mxu0 %v468
    %650 = vmatprep.subr.bf16.mxu0 0
    %651 = vmatpush1.bf16.msra.mxu0 %v469
    %652 = vmatprep.subr.bf16.mxu0 0
    %653 = vmatpush1.bf16.msra.mxu0 %v470
    %654 = vmatprep.subr.bf16.mxu0 0
    %655 = vmatpush1.bf16.msra.mxu0 %v471
    %656 = vmatprep.subr.bf16.mxu0 0
    %657 = vmatpush1.bf16.msra.mxu0 %v472
    %658 = vmatprep.subr.bf16.mxu0 0
    %659 = vmatpush1.bf16.msra.mxu0 %v473
    %660 = vmatprep.subr.bf16.mxu0 0
    %661 = vmatpush1.bf16.msra.mxu0 %v474
    %662 = vmatprep.subr.bf16.mxu0 0
    %663 = vmatpush1.bf16.msra.mxu0 %v475
    %664 = vmatprep.subr.bf16.mxu0 0
    %665 = vmatpush1.bf16.msra.mxu0 %v476
    %666 = vmatprep.subr.bf16.mxu0 0
    %667 = vmatpush1.bf16.msra.mxu0 %v477
    %668 = vmatprep.subr.bf16.mxu0 0
    %669 = vmatpush1.bf16.msra.mxu0 %v478
    %670 = vmatprep.subr.bf16.mxu0 0
    %671 = vmatpush1.bf16.msra.mxu0 %v479
    %672 = vmatprep.mubr.bf16.mxu0 %v165
    %673 = vmatmul.mubr.bf16.gmra.mrb[0].mxu0 %v164
    %v674 = vpop.f32.mrb[0].mxu0
    %v675 = vadd.f32 %v635, %v674
    %v676 = vpop.f32.mrb[0].mxu0
    %v677 = vpop.f32.mrb[0].mxu0
    %v678 = vpop.f32.mrb[0].mxu0
    %679 = vdwg.mxu0
    %680 = vmatprep.subr.bf16.mxu0 0
    %681 = vmatpush1.bf16.msra.mxu0 %v480
    %682 = vmatprep.subr.bf16.mxu0 0
    %683 = vmatpush1.bf16.msra.mxu0 %v481
    %684 = vmatprep.subr.bf16.mxu0 0
    %685 = vmatpush1.bf16.msra.mxu0 %v482
    %686 = vmatprep.subr.bf16.mxu0 0
    %687 = vmatpush1.bf16.msra.mxu0 %v483
    %688 = vmatprep.subr.bf16.mxu0 0
    %689 = vmatpush1.bf16.msra.mxu0 %v484
    %690 = vmatprep.subr.bf16.mxu0 0
    %691 = vmatpush1.bf16.msra.mxu0 %v485
    %692 = vmatprep.subr.bf16.mxu0 0
    %693 = vmatpush1.bf16.msra.mxu0 %v486
    %694 = vmatprep.subr.bf16.mxu0 0
    %695 = vmatpush1.bf16.msra.mxu0 %v487
    %696 = vmatprep.subr.bf16.mxu0 0
    %697 = vmatpush1.bf16.msra.mxu0 %v488
    %698 = vmatprep.subr.bf16.mxu0 0
    %699 = vmatpush1.bf16.msra.mxu0 %v489
    %700 = vmatprep.subr.bf16.mxu0 0
    %701 = vmatpush1.bf16.msra.mxu0 %v490
    %702 = vmatprep.subr.bf16.mxu0 0
    %703 = vmatpush1.bf16.msra.mxu0 %v491
    %704 = vmatprep.subr.bf16.mxu0 0
    %705 = vmatpush1.bf16.msra.mxu0 %v492
    %706 = vmatprep.subr.bf16.mxu0 0
    %707 = vmatpush1.bf16.msra.mxu0 %v493
    %708 = vmatprep.subr.bf16.mxu0 0
    %709 = vmatpush1.bf16.msra.mxu0 %v494
    %710 = vmatprep.subr.bf16.mxu0 0
    %711 = vmatpush1.bf16.msra.mxu0 %v495
    %712 = vmatprep.mubr.bf16.mxu0 %v167
    %713 = vmatmul.mubr.bf16.gmra.mrb[0].mxu0 %v166
    %v714 = vpop.f32.mrb[0].mxu0
    %v715 = vadd.f32 %v675, %v714
    %v716 = vpop.f32.mrb[0].mxu0
    %v717 = vpop.f32.mrb[0].mxu0
    %v718 = vpop.f32.mrb[0].mxu0
    %719 = vdwg.mxu0
    %v720 = vrot.slane %v715, 4
    %v721 = vadd.f32 %v715, %v720
    %v722 = vrot.slane %v721, 2
    %v723 = vadd.f32 %v721, %v722
    %v724 = vrot.slane %v723, 1
    %v725 = vadd.f32 %v723, %v724
    %v726 = vmul.f32 %v715, %v715
    %v727 = vrot.slane %v726, 4
    %v728 = vadd.f32 %v726, %v727
    %v729 = vrot.slane %v728, 2
    %v730 = vadd.f32 %v728, %v729
    %v731 = vrot.slane %v730, 1
    %v732 = vadd.f32 %v730, %v731
    %v733 = vmul.f32 %v725, 0.125
    %v734 = vmul.f32 %v732, 0.125
    %v735 = vmul.f32 %v733, %v733
    %v736 = vsub.f32 %v734, %v735
    %v737 = vmax.f32 %v736, 0.0
    %v738 = vld [vmem:[%s2] sm:$0x1]
    %v739 = vld [vmem:[%s2 + $0x1] sm:$0x1]
    %v740 = vadd.f32 %v737, 1e-05
    %v741 = vrsqrt.pop %v740
    %v742 = vmul.f32 %v738, %v741
    %v743 = vmul.f32 %v733, %v742
    %v744 = vsub.f32 %v739, %v743
    %v745 = vlaneseq
    %v746 = vshrl.u32 %v745, 7
    %v747 = vsub.s32 0, %v746
    %v748 = vrot.slane %v742, %v747
    %v749 = vmul.f32 %v715, %v748
    %v750 = vlaneseq
    %v751 = vshrl.u32 %v750, 7
    %v752 = vsub.s32 0, %v751
    %v753 = vrot.slane %v744, %v752
    %v754 = vadd.f32 %v749, %v753
    %v755 = vmax.f32 %v754, 0.0
    %756 = vst [vmem:[#allocation2] sm:$0xff] %v755
    // Predicated region
    $region14: #{cnn3_forward.5} parent=1 // pred_check
      _
    $region15: #{cnn3_forward.5} parent=1 // pred_check_branch
      %758 = sbr.rel (0) target = $region17
    $region16: #{cnn3_forward.5} parent=1 // pred_region
      %s760 = ssub.s32 128, 128
      %761 = vsyncadd [#allocation3], %s760
      %s763 = sshll.u32 [#allocation2], 4
      %s764 = int_to_ptr.vmem [resolvable:$true] %s763
      %766 = dma.vmem_to_hbm [thread:$0]  %s764, 128, %s3, [#allocation3]
    $region17: #{cnn3_forward.5} parent=1 // pred_fallthru
      _
    // Predicated region
    $region18: #{cnn3_forward.5} parent=1 // pred_check
      _
    $region19: #{cnn3_forward.5} parent=1 // pred_check_branch
      %768 = sbr.rel (0) target = $region21
    $region20: #{cnn3_forward.5} parent=1 // pred_region
      %769 = dma.done [#allocation3], 128
    $region21: #{cnn3_forward.5} parent=1 // pred_fallthru
      _
    %770 = vsyncpa [#allocation3], 1

</llo_original>
